<compile_context>
chip_gen: v6e
topology: v6e:2x2x1
jax: 0.10.0
libtpu: 0.0.40
codegen_flags: <defaults>
</compile_context>

<pallas_src>
import jax
import jax.numpy as jnp
from jax.experimental import pallas as pl
from jax.experimental.pallas import tpu as pltpu


_VMEM_LIMIT = 32 * 1024 * 1024  # explicit scoped-VMEM budget (safe on v5e..v7x)


def _ceil_to(x, m):
    return ((x + m - 1) // m) * m


def _pick_t_tile(T, target=256):
    """T tile: multiple of 8 (sublane), capped at `target` (per-step overhead
    amortization); the wrapper pads T up to a multiple of the tile."""
    return min(_ceil_to(T, 8), _ceil_to(target, 8))


def _pick_u_pad(U, V):
    """Padded U: multiple of 8 with (U_pad * V) a multiple of 128 so the
    packed output last dim is lane-dense (unmasked stores)."""
    u0 = _ceil_to(U, 8)
    for cand in range(u0, u0 + 128, 8):
        if (cand * V) % 128 == 0:
            return cand
    return u0  # still correct, just not lane-dense


# ---------------------------------------------------------------------------
# Fused kernel: projections + joint + output projection + log_softmax
# ---------------------------------------------------------------------------
def _joiner_kernel(s_ref, b_ref, wsh_ref, bsh_ref, wbh_ref, bbh_ref,
                   wout_ref, bout_ref, o_ref):
    tT = s_ref.shape[1]          # T tile (multiple of 8)
    Up = b_ref.shape[1]          # padded U (multiple of 8)
    Hp = wsh_ref.shape[1]        # padded hidden (multiple of 128)
    V = wout_ref.shape[1]
    hi = jax.lax.Precision.HIGHEST

    # --- fused Stage 1: tiny MXU work, no HBM round trip for sp / bq -------
    sp = jnp.dot(s_ref[0], wsh_ref[...],
                 preferred_element_type=jnp.float32, precision=hi)
    sp = sp + bsh_ref[...]                                   # (tT, Hp)
    bq = jnp.dot(b_ref[0], wbh_ref[...],
                 preferred_element_type=jnp.float32, precision=hi)
    bq = jnp.maximum(bq + bbh_ref[...], 0.0)                 # (Up, Hp), relu'd

    # --- joint, u-major: z[u*tT + t, :] = relu(bq)[u, :] * sp[t, :] --------
    # Leading-dim merge is layout-preserving (tT % 8 == 0, Hp % 128 == 0).
    z = (bq[:, None, :] * sp[None, :, :]).reshape(Up * tT, Hp)

    # --- single output projection for the whole tile (one MXU fill/drain) --
    logits = jnp.dot(z, wout_ref[...],
                     preferred_element_type=jnp.float32, precision=hi)
    logits = logits + bout_ref[...]                          # (Up*tT, V)

    # --- row-wise, numerically stable log_softmax (exp computed once) ------
    m = jnp.max(logits, axis=-1, keepdims=True)
    shifted = logits - m
    lse = jnp.log(jnp.sum(jnp.exp(shifted), axis=-1, keepdims=True))
    logp = shifted - lse                                     # (Up*tT, V)

    # --- lane-dense pack: chunk u is a vreg-aligned contiguous sublane slice;
    # concatenating along lanes yields (tT, Up*V) with last dim % 128 == 0 ---
    o_ref[0] = jnp.concatenate(
        [logp[u * tT:(u + 1) * tT, :] for u in range(Up)], axis=-1)


def joiner_forward(s, b, params):
    """s: (N, T, sks) f32, b: (N, U, bks) f32 -> (N, T, U, V) f32."""
    wsh, bsh, wbh, bbh, wout, bout = (
        params["wsh"], params["bsh"], params["wbh"], params["bbh"],
        params["wout"], params["bout"])
    N, T, sks = s.shape
    _, U, bks = b.shape
    H = wsh.shape[1]
    V = wout.shape[1]

    # --- hidden padding to 128 (weight-side, mathematically inert) ---------
    Hp = _ceil_to(H, 128)
    dh = Hp - H
    wsh_p = jnp.pad(wsh, ((0, 0), (0, dh)))
    bsh_p = jnp.pad(bsh, ((0, 0), (0, dh)))
    wbh_p = jnp.pad(wbh, ((0, 0), (0, dh)))
    bbh_p = jnp.pad(bbh, ((0, 0), (0, dh)))
    wout_p = jnp.pad(wout, ((0, dh), (0, 0)))

    # --- T / U padding so every tile is (8,128)-aligned & output lane-dense -
    tT = _pick_t_tile(T)
    Tp = _ceil_to(T, tT)
    Up = _pick_u_pad(U, V)
    s_p = jnp.pad(s, ((0, 0), (0, Tp - T), (0, 0))) if Tp != T else s
    b_p = jnp.pad(b, ((0, 0), (0, Up - U), (0, 0))) if Up != U else b

    grid = (N, Tp // tT)
    grid_spec = pltpu.PrefetchScalarGridSpec(
        num_scalar_prefetch=0,
        grid=grid,
        in_specs=[
            pl.BlockSpec((1, tT, sks), lambda n, ti: (n, ti, 0)),
            pl.BlockSpec((1, Up, bks), lambda n, ti: (n, 0, 0)),  # once per n
            pl.BlockSpec((sks, Hp), lambda n, ti: (0, 0)),        # resident
            pl.BlockSpec((1, Hp), lambda n, ti: (0, 0)),
            pl.BlockSpec((bks, Hp), lambda n, ti: (0, 0)),
            pl.BlockSpec((1, Hp), lambda n, ti: (0, 0)),
            pl.BlockSpec((Hp, V), lambda n, ti: (0, 0)),
            pl.BlockSpec((1, V), lambda n, ti: (0, 0)),
        ],
        out_specs=pl.BlockSpec((1, tT, Up * V), lambda n, ti: (n, ti, 0)),
    )

    out_p = pl.pallas_call(
        _joiner_kernel,
        out_shape=jax.ShapeDtypeStruct((N, Tp, Up * V), jnp.float32),
        grid_spec=grid_spec,
        compiler_params=pltpu.CompilerParams(
            dimension_semantics=("parallel", "parallel"),
            vmem_limit_bytes=_VMEM_LIMIT),
    )(s_p, b_p, wsh_p, bsh_p, wbh_p, bbh_p, wout_p, bout)

    # lane-dense (N, Tp, Up*V) -> (N, Tp, Up, V): free reshape; slice off pad.
    return out_p.reshape(N, Tp, Up, V)[:, :T, :U, :]


def joiner_reference(s, b, params):
    """Pure-JAX reference mirroring the PyTorch forward."""
    sp = jnp.einsum("nti,ih->nth", s, params["wsh"]) + params["bsh"]
    bp = jnp.einsum("nui,ih->nuh", b, params["wbh"]) + params["bbh"]
    z = sp[:, :, None, :] * jax.nn.relu(bp)[:, None, :, :]
    logits = jnp.einsum("ntuh,hv->ntuv", z, params["wout"]) + params["bout"]
    return jax.nn.log_softmax(logits, axis=-1)


def init_params(key, sks=96, bks=32, hidden=96, vocab=32):
    # PyTorch Linear weights are stored transposed; here weights are (in, out)
    # so the kernel can use x @ W directly.
    ks = jax.random.split(key, 6)
    scale = 0.05
    return {
        "wsh": scale * jax.random.normal(ks[0], (sks, hidden), jnp.float32),
        "bsh": scale * jax.random.normal(ks[1], (1, hidden), jnp.float32),
        "wbh": scale * jax.random.normal(ks[2], (bks, hidden), jnp.float32),
        "bbh": scale * jax.random.normal(ks[3], (1, hidden), jnp.float32),
        "wout": scale * jax.random.normal(ks[4], (hidden, vocab), jnp.float32),
        "bout": scale * jax.random.normal(ks[5], (1, vocab), jnp.float32),
    }


if __name__ == "__main__":
    # Small shapes consistent with the module defaults (sks=96, bks=32, hidden=96).
    N, T, U = 2, 8, 8
    SKS, BKS, HID, VOCAB = 96, 32, 96, 32

    key = jax.random.PRNGKey(0)
    k_s, k_b, k_p = jax.random.split(key, 3)
    s = jax.random.normal(k_s, (N, T, SKS), jnp.float32)
    b = jax.random.normal(k_b, (N, U, BKS), jnp.float32)
    params = init_params(k_p, SKS, BKS, HID, VOCAB)

    out = joiner_forward(s, b, params)
    out = jax.block_until_ready(out)

    ref = joiner_reference(s, b, params)
    assert out.shape == (N, T, U, VOCAB)
    assert jnp.allclose(out, ref, atol=1e-4, rtol=1e-4)

    print("KERNEL_OK")
</pallas_src>

<mosaic_0001>
module attributes {stable_mosaic.version = 11 : i64} {
  func.func @_joiner_kernel(%arg0: i32, %arg1: i32, %arg2: memref<1x8x96xf32, #tpu.memory_space<vmem>>, %arg3: memref<1x8x32xf32, #tpu.memory_space<vmem>>, %arg4: memref<96x128xf32, #tpu.memory_space<vmem>>, %arg5: memref<1x128xf32, #tpu.memory_space<vmem>>, %arg6: memref<32x128xf32, #tpu.memory_space<vmem>>, %arg7: memref<1x128xf32, #tpu.memory_space<vmem>>, %arg8: memref<128x32xf32, #tpu.memory_space<vmem>>, %arg9: memref<1x32xf32, #tpu.memory_space<vmem>>, %arg10: memref<1x8x256xf32, #tpu.memory_space<vmem>>) attributes {dimension_semantics = [#tpu.dimension_semantics<parallel>, #tpu.dimension_semantics<parallel>], iteration_bounds = array<i64: 2, 1>, scalar_prefetch = 0 : i64, scratch_operands = 0 : i64, tpu.core_type = #tpu.core_type<tc>, window_params = [{transform_indices = @transform_0, window_bounds = array<i64: 1, 8, 96>}, {transform_indices = @transform_1, window_bounds = array<i64: 1, 8, 32>}, {pipeline_mode = #tpu.pipeline_mode<synchronous>, transform_indices = @transform_2, window_bounds = array<i64: 96, 128>}, {pipeline_mode = #tpu.pipeline_mode<synchronous>, transform_indices = @transform_3, window_bounds = array<i64: 1, 128>}, {pipeline_mode = #tpu.pipeline_mode<synchronous>, transform_indices = @transform_4, window_bounds = array<i64: 32, 128>}, {pipeline_mode = #tpu.pipeline_mode<synchronous>, transform_indices = @transform_5, window_bounds = array<i64: 1, 128>}, {pipeline_mode = #tpu.pipeline_mode<synchronous>, transform_indices = @transform_6, window_bounds = array<i64: 128, 32>}, {pipeline_mode = #tpu.pipeline_mode<synchronous>, transform_indices = @transform_7, window_bounds = array<i64: 1, 32>}, {transform_indices = @transform_8, window_bounds = array<i64: 1, 8, 256>}]} {
    %c0 = arith.constant 0 : index
    %c0_0 = arith.constant 0 : index
    %c0_1 = arith.constant 0 : index
    %0 = vector.load %arg2[%c0, %c0_0, %c0_1] : memref<1x8x96xf32, #tpu.memory_space<vmem>>, vector<1x8x96xf32>
    %1 = vector.shape_cast %0 : vector<1x8x96xf32> to vector<8x96xf32>
    %c0_2 = arith.constant 0 : index
    %c0_3 = arith.constant 0 : index
    %2 = vector.load %arg4[%c0_2, %c0_3] : memref<96x128xf32, #tpu.memory_space<vmem>>, vector<96x128xf32>
    %cst = arith.constant dense<0.000000e+00> : vector<8x128xf32>
    %3 = tpu.matmul %1, %2, %cst {dimension_numbers = #tpu.dot_dimension_numbers<[1], [0], [0], [1], [0, 0, 1, 1], [], []>, precision = #tpu.contract_precision<fp32>} : vector<8x96xf32>, vector<96x128xf32>, vector<8x128xf32> -> vector<8x128xf32>
    %c0_4 = arith.constant 0 : index
    %c0_5 = arith.constant 0 : index
    %4 = vector.load %arg5[%c0_4, %c0_5] : memref<1x128xf32, #tpu.memory_space<vmem>>, vector<1x128xf32>
    %5 = vector.broadcast %4 : vector<1x128xf32> to vector<8x128xf32>
    %6 = arith.addf %3, %5 : vector<8x128xf32>
    %c0_6 = arith.constant 0 : index
    %c0_7 = arith.constant 0 : index
    %c0_8 = arith.constant 0 : index
    %7 = vector.load %arg3[%c0_6, %c0_7, %c0_8] : memref<1x8x32xf32, #tpu.memory_space<vmem>>, vector<1x8x32xf32>
    %8 = vector.shape_cast %7 : vector<1x8x32xf32> to vector<8x32xf32>
    %c0_9 = arith.constant 0 : index
    %c0_10 = arith.constant 0 : index
    %9 = vector.load %arg6[%c0_9, %c0_10] : memref<32x128xf32, #tpu.memory_space<vmem>>, vector<32x128xf32>
    %cst_11 = arith.constant dense<0.000000e+00> : vector<8x128xf32>
    %10 = tpu.matmul %8, %9, %cst_11 {dimension_numbers = #tpu.dot_dimension_numbers<[1], [0], [0], [1], [0, 0, 1, 1], [], []>, precision = #tpu.contract_precision<fp32>} : vector<8x32xf32>, vector<32x128xf32>, vector<8x128xf32> -> vector<8x128xf32>
    %c0_12 = arith.constant 0 : index
    %c0_13 = arith.constant 0 : index
    %11 = vector.load %arg7[%c0_12, %c0_13] : memref<1x128xf32, #tpu.memory_space<vmem>>, vector<1x128xf32>
    %12 = vector.broadcast %11 : vector<1x128xf32> to vector<8x128xf32>
    %13 = arith.addf %10, %12 : vector<8x128xf32>
    %cst_14 = arith.constant 0.000000e+00 : f32
    %14 = vector.broadcast %cst_14 : f32 to vector<8x128xf32>
    %15 = arith.maximumf %13, %14 : vector<8x128xf32>
    %16 = vector.shape_cast %15 : vector<8x128xf32> to vector<8x1x128xf32>
    %17 = vector.shape_cast %6 : vector<8x128xf32> to vector<1x8x128xf32>
    %18 = vector.broadcast %16 : vector<8x1x128xf32> to vector<8x8x128xf32>
    %19 = vector.broadcast %17 : vector<1x8x128xf32> to vector<8x8x128xf32>
    %20 = arith.mulf %18, %19 : vector<8x8x128xf32>
    %21 = vector.shape_cast %20 : vector<8x8x128xf32> to vector<64x128xf32>
    %c0_15 = arith.constant 0 : index
    %c0_16 = arith.constant 0 : index
    %22 = vector.load %arg8[%c0_15, %c0_16] : memref<128x32xf32, #tpu.memory_space<vmem>>, vector<128x32xf32>
    %cst_17 = arith.constant dense<0.000000e+00> : vector<64x32xf32>
    %23 = tpu.matmul %21, %22, %cst_17 {dimension_numbers = #tpu.dot_dimension_numbers<[1], [0], [0], [1], [0, 0, 1, 1], [], []>, precision = #tpu.contract_precision<fp32>} : vector<64x128xf32>, vector<128x32xf32>, vector<64x32xf32> -> vector<64x32xf32>
    %c0_18 = arith.constant 0 : index
    %c0_19 = arith.constant 0 : index
    %24 = vector.load %arg9[%c0_18, %c0_19] : memref<1x32xf32, #tpu.memory_space<vmem>>, vector<1x32xf32>
    %25 = vector.broadcast %24 : vector<1x32xf32> to vector<64x32xf32>
    %26 = arith.addf %23, %25 : vector<64x32xf32>
    %cst_20 = arith.constant dense<0xFF800000> : vector<64xf32>
    %27 = vector.multi_reduction <maximumf>, %26, %cst_20 [1] : vector<64x32xf32> to vector<64xf32>
    %28 = vector.shape_cast %27 : vector<64xf32> to vector<64x1xf32>
    %29 = vector.broadcast %28 : vector<64x1xf32> to vector<64x32xf32>
    %30 = arith.subf %26, %29 : vector<64x32xf32>
    %31 = math.exp %30 : vector<64x32xf32>
    %cst_21 = arith.constant dense<0.000000e+00> : vector<64xf32>
    %32 = vector.multi_reduction <add>, %31, %cst_21 [1] : vector<64x32xf32> to vector<64xf32>
    %33 = vector.shape_cast %32 : vector<64xf32> to vector<64x1xf32>
    %34 = math.log %33 : vector<64x1xf32>
    %35 = vector.broadcast %34 : vector<64x1xf32> to vector<64x32xf32>
    %36 = arith.subf %30, %35 : vector<64x32xf32>
    %37 = vector.extract_strided_slice %36 {offsets = [0, 0], sizes = [8, 32], strides = [1, 1]} : vector<64x32xf32> to vector<8x32xf32>
    %38 = vector.extract_strided_slice %36 {offsets = [8, 0], sizes = [8, 32], strides = [1, 1]} : vector<64x32xf32> to vector<8x32xf32>
    %39 = vector.extract_strided_slice %36 {offsets = [16, 0], sizes = [8, 32], strides = [1, 1]} : vector<64x32xf32> to vector<8x32xf32>
    %40 = vector.extract_strided_slice %36 {offsets = [24, 0], sizes = [8, 32], strides = [1, 1]} : vector<64x32xf32> to vector<8x32xf32>
    %41 = vector.extract_strided_slice %36 {offsets = [32, 0], sizes = [8, 32], strides = [1, 1]} : vector<64x32xf32> to vector<8x32xf32>
    %42 = vector.extract_strided_slice %36 {offsets = [40, 0], sizes = [8, 32], strides = [1, 1]} : vector<64x32xf32> to vector<8x32xf32>
    %43 = vector.extract_strided_slice %36 {offsets = [48, 0], sizes = [8, 32], strides = [1, 1]} : vector<64x32xf32> to vector<8x32xf32>
    %44 = vector.extract_strided_slice %36 {offsets = [56, 0], sizes = [8, 32], strides = [1, 1]} : vector<64x32xf32> to vector<8x32xf32>
    %45 = tpu.concatenate %37, %38, %39, %40, %41, %42, %43, %44 in 1 : vector<8x32xf32>, vector<8x32xf32>, vector<8x32xf32>, vector<8x32xf32>, vector<8x32xf32>, vector<8x32xf32>, vector<8x32xf32>, vector<8x32xf32> -> vector<8x256xf32>
    %c0_22 = arith.constant 0 : index
    %c0_23 = arith.constant 0 : index
    %c0_24 = arith.constant 0 : index
    %46 = vector.load %arg10[%c0_22, %c0_23, %c0_24] : memref<1x8x256xf32, #tpu.memory_space<vmem>>, vector<1x8x256xf32>
    %47 = vector.shape_cast %46 : vector<1x8x256xf32> to vector<8x256xf32>
    %48 = vector.shape_cast %45 : vector<8x256xf32> to vector<1x8x256xf32>
    tpu.vector_store %arg10[%c0_22, %c0_23, %c0_24], %48 {strides = array<i32>} : memref<1x8x256xf32, #tpu.memory_space<vmem>>, vector<1x8x256xf32>,
    return
  }
  func.func @transform_0(%arg0: i32, %arg1: i32) -> (i32, i32, i32) {
    %c0_i32 = arith.constant 0 : i32
    %c0_i32_0 = arith.constant 0 : i32
    return %arg0, %arg1, %c0_i32 : i32, i32, i32
  }
  func.func @transform_1(%arg0: i32, %arg1: i32) -> (i32, i32, i32) {
    %c0_i32 = arith.constant 0 : i32
    %c0_i32_0 = arith.constant 0 : i32
    %c0_i32_1 = arith.constant 0 : i32
    return %arg0, %c0_i32, %c0_i32_0 : i32, i32, i32
  }
  func.func @transform_2(%arg0: i32, %arg1: i32) -> (i32, i32) {
    %c0_i32 = arith.constant 0 : i32
    %c0_i32_0 = arith.constant 0 : i32
    %c0_i32_1 = arith.constant 0 : i32
    return %c0_i32, %c0_i32_0 : i32, i32
  }
  func.func @transform_3(%arg0: i32, %arg1: i32) -> (i32, i32) {
    %c0_i32 = arith.constant 0 : i32
    %c0_i32_0 = arith.constant 0 : i32
    %c0_i32_1 = arith.constant 0 : i32
    return %c0_i32, %c0_i32_0 : i32, i32
  }
  func.func @transform_4(%arg0: i32, %arg1: i32) -> (i32, i32) {
    %c0_i32 = arith.constant 0 : i32
    %c0_i32_0 = arith.constant 0 : i32
    %c0_i32_1 = arith.constant 0 : i32
    return %c0_i32, %c0_i32_0 : i32, i32
  }
  func.func @transform_5(%arg0: i32, %arg1: i32) -> (i32, i32) {
    %c0_i32 = arith.constant 0 : i32
    %c0_i32_0 = arith.constant 0 : i32
    %c0_i32_1 = arith.constant 0 : i32
    return %c0_i32, %c0_i32_0 : i32, i32
  }
  func.func @transform_6(%arg0: i32, %arg1: i32) -> (i32, i32) {
    %c0_i32 = arith.constant 0 : i32
    %c0_i32_0 = arith.constant 0 : i32
    %c0_i32_1 = arith.constant 0 : i32
    return %c0_i32, %c0_i32_0 : i32, i32
  }
  func.func @transform_7(%arg0: i32, %arg1: i32) -> (i32, i32) {
    %c0_i32 = arith.constant 0 : i32
    %c0_i32_0 = arith.constant 0 : i32
    %c0_i32_1 = arith.constant 0 : i32
    return %c0_i32, %c0_i32_0 : i32, i32
  }
  func.func @transform_8(%arg0: i32, %arg1: i32) -> (i32, i32, i32) {
    %c0_i32 = arith.constant 0 : i32
    %c0_i32_0 = arith.constant 0 : i32
    return %arg0, %arg1, %c0_i32 : i32, i32, i32
  }
}

</mosaic_0001>

<llo_original>
// kernel: tpu_custom_call.1
$region0: #{tpu_custom_call.1}
  #allocation0 [shape = 'u32[]', space=smem, size = 0x4, offset = 0x4, fixed_abs, tag = 'smem constant byte address 0x4 - core index']
  #allocation1 [shape = 'u32[144,128]{1,0:T(1,128)}', space=vmem, size = 0x12000, scoped, tag = 'internal scratch']
  %s0 = inlined_call_operand.vmem [shape: f32[2,8,96], index: 0, kind: input, shape index: {}]
  %s1 = inlined_call_operand.vmem [shape: f32[2,8,32], index: 1, kind: input, shape index: {}]
  %s2 = inlined_call_operand.vmem [shape: f32[96,128], index: 2, kind: input, shape index: {}]
  %s3 = inlined_call_operand.vmem [shape: f32[1,128], index: 3, kind: input, shape index: {}]
  %s4 = inlined_call_operand.vmem [shape: f32[32,128], index: 4, kind: input, shape index: {}]
  %s5 = inlined_call_operand.vmem [shape: f32[1,128], index: 5, kind: input, shape index: {}]
  %s6 = inlined_call_operand.vmem [shape: f32[128,32], index: 6, kind: input, shape index: {}]
  %s7 = inlined_call_operand.vmem [shape: f32[1,32], index: 7, kind: input, shape index: {}]
  %s8 = inlined_call_operand.hbm [shape: f32[2,8,256], index: 8, kind: output, shape index: {}]
  %s9 = sld [smem:[#allocation0]]
  $region65: #{tpu_custom_call.1} parent=0
    _
  %s11 = ssub.s32 1, %s9
  %s12 = scalar_select 0, %s11, %s9
  $region1: #{tpu_custom_call.1} parent=0
    #allocation2 [shape = 'u8[16384]{0}', space=vmem, size = 0x4000, scoped, tag = 'output window, operand 0']
    #allocation3 [shape = 's32[2]{0}', space=sflag, size = 0x8, scoped, tag = 'scoped memory for tpu_custom_call.1']
    %13 = vsyncpa [#allocation3], 0
    %s14 = scalar_lea.sflag [#allocation3], 1
    %15 = vsyncpa %s14, 0
    loop: start=0, step=1, limit=4
    $region2: #{tpu_custom_call.1} parent=1 // loop_pre_header
      _
    $region3: #{tpu_custom_call.1} parent=1 // loop_header
      %s17 = sphi 0, %s21
      %p18 = scmp.ge.s32.totalorder %s17, 4
      %s24 = sphi 0, %s36
      %s25 = sphi 0, %s32
      %s26 = sphi 0, %s24
      %s27 = sphi 0, %s25
      %s28 = sphi 0, %s26
      %s29 = sphi 0, %s27
      %s41 = sphi 0, %s43
      %s44 = sphi 0, %s41
      %s45 = sphi 0, %s44
      %s61 = sphi 0, %s45
      %s67 = sphi 0, %s69
      %s70 = sphi 0, %s67
      %s71 = sphi 0, %s70
      %s87 = sphi 0, %s71
      %s91 = sphi 0, %s91
      %s93 = sphi 0, %s91
      %s94 = sphi 0, %s93
      %s108 = sphi 0, %s94
      %s112 = sphi 0, %s112
      %s114 = sphi 0, %s112
      %s115 = sphi 0, %s114
      %s129 = sphi 0, %s115
      %s133 = sphi 0, %s133
      %s135 = sphi 0, %s133
      %s136 = sphi 0, %s135
      %s150 = sphi 0, %s136
      %s154 = sphi 0, %s154
      %s156 = sphi 0, %s154
      %s157 = sphi 0, %s156
      %s171 = sphi 0, %s157
      %s175 = sphi 0, %s175
      %s177 = sphi 0, %s175
      %s178 = sphi 0, %s177
      %s192 = sphi 0, %s178
      %s196 = sphi 0, %s196
      %s198 = sphi 0, %s196
      %s199 = sphi 0, %s198
      %s213 = sphi 0, %s199
      %s221 = sphi 0, %s223
      %s224 = sphi 0, %s221
      %s225 = sphi 0, %s224
      %s241 = sphi 0, %s225
    $region4: #{tpu_custom_call.1} parent=1 // loop_header_branch
      %20 = sbr.rel (%p18) target = $region8
    $region5: #{tpu_custom_call.1} parent=1 // loop_body
      %s22 = ssub.s32 %s17, 1
      %s23 = ssub.s32 %s17, 2
      %s30 = sadd.s32 1, %s25
      %p31 = scmp.ge.s32.totalorder %s30, 1
      %s32 = scalar_select %p31, 0, %s30
      %s33 = sadd.s32 1, %s24
      %s34 = scalar_select %p31, %s33, %s24
      %p35 = scmp.ge.s32.totalorder %s34, 2
      %s36 = scalar_select %p35, 0, %s34
      %s37 = ssub.s32 %s24, %s36
      %s38 = ssub.s32 %s25, %s32
      %s39 = sor.u32 %s37, %s38
      %p40 = scmp.eq.s32.totalorder %s39, 0
      %s42 = sadd.s32 %s41, 1
      %s43 = scalar_select %p40, %s41, %s42
      %p46 = pneg %p40
      %p47 = scmp.eq.s32.totalorder %s17, 1
      %p48 = por %p46, %p47
      %p49 = scmp.ne.s32.totalorder %s41, %s44
      %p50 = scmp.eq.s32.totalorder %s17, 0
      %p51 = por %p49, %p50
      %p52 = scmp.ne.s32.totalorder %s41, %s44
      %p53 = scmp.eq.s32.totalorder %s22, 1
      %p54 = por %p52, %p53
      %p55 = scmp.ne.s32.totalorder %s44, %s45
      %p56 = scmp.eq.s32.totalorder %s22, 0
      %p57 = por %p55, %p56
      %p58 = scmp.ne.s32.totalorder %s44, %s45
      %p59 = scmp.eq.s32.totalorder %s23, 1
      %p60 = por %p58, %p59
      %p62 = scmp.ne.s32.totalorder %s45, %s61
      %p63 = scmp.eq.s32.totalorder %s23, 0
      %p64 = por %p62, %p63
      %s65 = ssub.s32 %s24, %s36
      %p66 = scmp.eq.s32.totalorder %s65, 0
      %s68 = sadd.s32 %s67, 1
      %s69 = scalar_select %p66, %s67, %s68
      %p72 = pneg %p66
      %p73 = scmp.eq.s32.totalorder %s17, 1
      %p74 = por %p72, %p73
      %p75 = scmp.ne.s32.totalorder %s67, %s70
      %p76 = scmp.eq.s32.totalorder %s17, 0
      %p77 = por %p75, %p76
      %p78 = scmp.ne.s32.totalorder %s67, %s70
      %p79 = scmp.eq.s32.totalorder %s22, 1
      %p80 = por %p78, %p79
      %p81 = scmp.ne.s32.totalorder %s70, %s71
      %p82 = scmp.eq.s32.totalorder %s22, 0
      %p83 = por %p81, %p82
      %p84 = scmp.ne.s32.totalorder %s70, %s71
      %p85 = scmp.eq.s32.totalorder %s23, 1
      %p86 = por %p84, %p85
      %p88 = scmp.ne.s32.totalorder %s71, %s87
      %p89 = scmp.eq.s32.totalorder %s23, 0
      %p90 = por %p88, %p89
      %s92 = sadd.s32 %s91, 1
      %p95 = scmp.eq.s32.totalorder %s17, 1
      %p96 = scmp.ne.s32.totalorder %s91, %s93
      %p97 = scmp.eq.s32.totalorder %s17, 0
      %p98 = por %p96, %p97
      %p99 = scmp.ne.s32.totalorder %s91, %s93
      %p100 = scmp.eq.s32.totalorder %s22, 1
      %p101 = por %p99, %p100
      %p102 = scmp.ne.s32.totalorder %s93, %s94
      %p103 = scmp.eq.s32.totalorder %s22, 0
      %p104 = por %p102, %p103
      %p105 = scmp.ne.s32.totalorder %s93, %s94
      %p106 = scmp.eq.s32.totalorder %s23, 1
      %p107 = por %p105, %p106
      %p109 = scmp.ne.s32.totalorder %s94, %s108
      %p110 = scmp.eq.s32.totalorder %s23, 0
      %p111 = por %p109, %p110
      %s113 = sadd.s32 %s112, 1
      %p116 = scmp.eq.s32.totalorder %s17, 1
      %p117 = scmp.ne.s32.totalorder %s112, %s114
      %p118 = scmp.eq.s32.totalorder %s17, 0
      %p119 = por %p117, %p118
      %p120 = scmp.ne.s32.totalorder %s112, %s114
      %p121 = scmp.eq.s32.totalorder %s22, 1
      %p122 = por %p120, %p121
      %p123 = scmp.ne.s32.totalorder %s114, %s115
      %p124 = scmp.eq.s32.totalorder %s22, 0
      %p125 = por %p123, %p124
      %p126 = scmp.ne.s32.totalorder %s114, %s115
      %p127 = scmp.eq.s32.totalorder %s23, 1
      %p128 = por %p126, %p127
      %p130 = scmp.ne.s32.totalorder %s115, %s129
      %p131 = scmp.eq.s32.totalorder %s23, 0
      %p132 = por %p130, %p131
      %s134 = sadd.s32 %s133, 1
      %p137 = scmp.eq.s32.totalorder %s17, 1
      %p138 = scmp.ne.s32.totalorder %s133, %s135
      %p139 = scmp.eq.s32.totalorder %s17, 0
      %p140 = por %p138, %p139
      %p141 = scmp.ne.s32.totalorder %s133, %s135
      %p142 = scmp.eq.s32.totalorder %s22, 1
      %p143 = por %p141, %p142
      %p144 = scmp.ne.s32.totalorder %s135, %s136
      %p145 = scmp.eq.s32.totalorder %s22, 0
      %p146 = por %p144, %p145
      %p147 = scmp.ne.s32.totalorder %s135, %s136
      %p148 = scmp.eq.s32.totalorder %s23, 1
      %p149 = por %p147, %p148
      %p151 = scmp.ne.s32.totalorder %s136, %s150
      %p152 = scmp.eq.s32.totalorder %s23, 0
      %p153 = por %p151, %p152
      %s155 = sadd.s32 %s154, 1
      %p158 = scmp.eq.s32.totalorder %s17, 1
      %p159 = scmp.ne.s32.totalorder %s154, %s156
      %p160 = scmp.eq.s32.totalorder %s17, 0
      %p161 = por %p159, %p160
      %p162 = scmp.ne.s32.totalorder %s154, %s156
      %p163 = scmp.eq.s32.totalorder %s22, 1
      %p164 = por %p162, %p163
      %p165 = scmp.ne.s32.totalorder %s156, %s157
      %p166 = scmp.eq.s32.totalorder %s22, 0
      %p167 = por %p165, %p166
      %p168 = scmp.ne.s32.totalorder %s156, %s157
      %p169 = scmp.eq.s32.totalorder %s23, 1
      %p170 = por %p168, %p169
      %p172 = scmp.ne.s32.totalorder %s157, %s171
      %p173 = scmp.eq.s32.totalorder %s23, 0
      %p174 = por %p172, %p173
      %s176 = sadd.s32 %s175, 1
      %p179 = scmp.eq.s32.totalorder %s17, 1
      %p180 = scmp.ne.s32.totalorder %s175, %s177
      %p181 = scmp.eq.s32.totalorder %s17, 0
      %p182 = por %p180, %p181
      %p183 = scmp.ne.s32.totalorder %s175, %s177
      %p184 = scmp.eq.s32.totalorder %s22, 1
      %p185 = por %p183, %p184
      %p186 = scmp.ne.s32.totalorder %s177, %s178
      %p187 = scmp.eq.s32.totalorder %s22, 0
      %p188 = por %p186, %p187
      %p189 = scmp.ne.s32.totalorder %s177, %s178
      %p190 = scmp.eq.s32.totalorder %s23, 1
      %p191 = por %p189, %p190
      %p193 = scmp.ne.s32.totalorder %s178, %s192
      %p194 = scmp.eq.s32.totalorder %s23, 0
      %p195 = por %p193, %p194
      %s197 = sadd.s32 %s196, 1
      %p200 = scmp.eq.s32.totalorder %s17, 1
      %p201 = scmp.ne.s32.totalorder %s196, %s198
      %p202 = scmp.eq.s32.totalorder %s17, 0
      %p203 = por %p201, %p202
      %p204 = scmp.ne.s32.totalorder %s196, %s198
      %p205 = scmp.eq.s32.totalorder %s22, 1
      %p206 = por %p204, %p205
      %p207 = scmp.ne.s32.totalorder %s198, %s199
      %p208 = scmp.eq.s32.totalorder %s22, 0
      %p209 = por %p207, %p208
      %p210 = scmp.ne.s32.totalorder %s198, %s199
      %p211 = scmp.eq.s32.totalorder %s23, 1
      %p212 = por %p210, %p211
      %p214 = scmp.ne.s32.totalorder %s199, %s213
      %p215 = scmp.eq.s32.totalorder %s23, 0
      %p216 = por %p214, %p215
      %s217 = ssub.s32 %s24, %s36
      %s218 = ssub.s32 %s25, %s32
      %s219 = sor.u32 %s217, %s218
      %p220 = scmp.eq.s32.totalorder %s219, 0
      %s222 = sadd.s32 %s221, 1
      %s223 = scalar_select %p220, %s221, %s222
      %p226 = pneg %p220
      %p227 = scmp.eq.s32.totalorder %s17, 1
      %p228 = por %p226, %p227
      %p229 = scmp.ne.s32.totalorder %s221, %s224
      %p230 = scmp.eq.s32.totalorder %s17, 0
      %p231 = por %p229, %p230
      %p232 = scmp.ne.s32.totalorder %s221, %s224
      %p233 = scmp.eq.s32.totalorder %s22, 1
      %p234 = por %p232, %p233
      %p235 = scmp.ne.s32.totalorder %s224, %s225
      %p236 = scmp.eq.s32.totalorder %s22, 0
      %p237 = por %p235, %p236
      %p238 = scmp.ne.s32.totalorder %s224, %s225
      %p239 = scmp.eq.s32.totalorder %s23, 1
      %p240 = por %p238, %p239
      %p242 = scmp.ne.s32.totalorder %s225, %s241
      %p243 = scmp.eq.s32.totalorder %s23, 0
      %p244 = por %p242, %p243
      %p245 = scmp.le.s32.totalorder 1, %s17
      %p246 = scmp.lt.s32.totalorder %s17, 3
      %p247 = pnand %p245, %p246
      %p248 = pneg %p247
      // Predicated region
      $region9: #{tpu_custom_call.1} parent=5 // pred_check
        _
      $region10: #{tpu_custom_call.1} parent=5 // pred_check_branch
        %250 = sbr.rel (%p247) target = $region12
      $region11: #{tpu_custom_call.1} parent=5 // pred_region
        %s251 = ssub.s32 %s17, 1
        // Predicated region
        $region13: #{tpu_custom_call.1} parent=11 // pred_check
          %p252 = pneg %p104
        $region14: #{tpu_custom_call.1} parent=11 // pred_check_branch
          %254 = sbr.rel (%p252) target = $region16
        $region15: #{tpu_custom_call.1} parent=11 // pred_region
          _
        $region16: #{tpu_custom_call.1} parent=11 // pred_fallthru
          _
        // Predicated region
        $region17: #{tpu_custom_call.1} parent=11 // pred_check
          %p255 = pneg %p125
        $region18: #{tpu_custom_call.1} parent=11 // pred_check_branch
          %257 = sbr.rel (%p255) target = $region20
        $region19: #{tpu_custom_call.1} parent=11 // pred_region
          _
        $region20: #{tpu_custom_call.1} parent=11 // pred_fallthru
          _
        // Predicated region
        $region21: #{tpu_custom_call.1} parent=11 // pred_check
          %p258 = pneg %p146
        $region22: #{tpu_custom_call.1} parent=11 // pred_check_branch
          %260 = sbr.rel (%p258) target = $region24
        $region23: #{tpu_custom_call.1} parent=11 // pred_region
          _
        $region24: #{tpu_custom_call.1} parent=11 // pred_fallthru
          _
        // Predicated region
        $region25: #{tpu_custom_call.1} parent=11 // pred_check
          %p261 = pneg %p167
        $region26: #{tpu_custom_call.1} parent=11 // pred_check_branch
          %263 = sbr.rel (%p261) target = $region28
        $region27: #{tpu_custom_call.1} parent=11 // pred_region
          _
        $region28: #{tpu_custom_call.1} parent=11 // pred_fallthru
          _
        // Predicated region
        $region29: #{tpu_custom_call.1} parent=11 // pred_check
          %p264 = pneg %p188
        $region30: #{tpu_custom_call.1} parent=11 // pred_check_branch
          %266 = sbr.rel (%p264) target = $region32
        $region31: #{tpu_custom_call.1} parent=11 // pred_region
          _
        $region32: #{tpu_custom_call.1} parent=11 // pred_fallthru
          _
        // Predicated region
        $region33: #{tpu_custom_call.1} parent=11 // pred_check
          %p267 = pneg %p209
        $region34: #{tpu_custom_call.1} parent=11 // pred_check_branch
          %269 = sbr.rel (%p267) target = $region36
        $region35: #{tpu_custom_call.1} parent=11 // pred_region
          _
        $region36: #{tpu_custom_call.1} parent=11 // pred_fallthru
          _
      $region12: #{tpu_custom_call.1} parent=5 // pred_fallthru
        _
      %p270 = scmp.lt.s32.totalorder %s17, 2
      // Predicated region
      $region37: #{tpu_custom_call.1} parent=5 // pred_check
        %p271 = pneg %p270
      $region38: #{tpu_custom_call.1} parent=5 // pred_check_branch
        %273 = sbr.rel (%p271) target = $region40
      $region39: #{tpu_custom_call.1} parent=5 // pred_region
        // Predicated region
        $region41: #{tpu_custom_call.1} parent=39 // pred_check
          %p274 = pneg %p51
        $region42: #{tpu_custom_call.1} parent=39 // pred_check_branch
          %276 = sbr.rel (%p274) target = $region44
        $region43: #{tpu_custom_call.1} parent=39 // pred_region
          %p277 = scmp.lt.s32.totalorder %s24, 1
          %s278 = scalar_select %p277, %s24, 1
          %p279 = scmp.lt.s32.totalorder %s25, 0
          %s280 = scalar_select %p279, %s25, 0
          %s281 = sadd.s32 %s280, %s278
          %s282 = smul.addr %s281, 8
          %s283 = scalar_lea.vmem %s0, %s282
        $region44: #{tpu_custom_call.1} parent=39 // pred_fallthru
          _
        // Predicated region
        $region45: #{tpu_custom_call.1} parent=39 // pred_check
          %p284 = pneg %p77
        $region46: #{tpu_custom_call.1} parent=39 // pred_check_branch
          %286 = sbr.rel (%p284) target = $region48
        $region47: #{tpu_custom_call.1} parent=39 // pred_region
          %p287 = scmp.lt.s32.totalorder %s24, 1
          %s288 = scalar_select %p287, %s24, 1
          %s289 = smul.addr %s288, 8
          %s290 = scalar_lea.vmem %s1, %s289
        $region48: #{tpu_custom_call.1} parent=39 // pred_fallthru
          _
      $region40: #{tpu_custom_call.1} parent=5 // pred_fallthru
        _
      %p291 = scmp.le.s32.totalorder 1, %s17
      %p292 = scmp.lt.s32.totalorder %s17, 3
      %p293 = pnand %p291, %p292
      %p294 = pneg %p293
      // Predicated region
      $region49: #{tpu_custom_call.1} parent=5 // pred_check
        _
      $region50: #{tpu_custom_call.1} parent=5 // pred_check_branch
        %296 = sbr.rel (%p293) target = $region52
      $region51: #{tpu_custom_call.1} parent=5 // pred_region
        %s297 = ssub.s32 %s17, 1
        %p298 = scmp.lt.s32.totalorder %s26, 1
        %s299 = scalar_select %p298, %s26, 1
        %p300 = scmp.lt.s32.totalorder %s27, 0
        %s301 = scalar_select %p300, %s27, 0
        %s302 = sadd.s32 %s301, %s299
        %s303 = smul.addr %s302, 8
        %s304 = scalar_lea.vmem %s0, %s303
        %p305 = pneg %p57
        %p306 = pneg %p54
        %p307 = scmp.lt.s32.totalorder %s26, 1
        %s308 = scalar_select %p307, %s26, 1
        %s309 = smul.addr %s308, 8
        %s310 = scalar_lea.vmem %s1, %s309
        %p311 = pneg %p83
        %p312 = pneg %p80
        %p313 = pneg %p104
        %p314 = pneg %p101
        %p315 = pneg %p125
        %p316 = pneg %p122
        %p317 = pneg %p146
        %p318 = pneg %p143
        %p319 = pneg %p167
        %p320 = pneg %p164
        %p321 = pneg %p188
        %p322 = pneg %p185
        %p323 = pneg %p209
        %p324 = pneg %p206
        %p325 = pneg %p237
        %p326 = pneg %p234
        %s327 = sand.u32 %s224, 1
        %s328 = scalar_lea.sflag [#allocation3], %s327
        %s329 = sand.u32 %s224, 1
        %s330 = smul.addr %s329, 16
        %s331 = scalar_lea.vmem [#allocation2], %s330
        %p332 = scmp.lt.s32.totalorder %s26, 1
        %s333 = scalar_select %p332, %s26, 1
        %p334 = scmp.lt.s32.totalorder %s27, 0
        %s335 = scalar_select %p334, %s27, 0
        %s336 = sadd.s32 %s335, %s333
        %s337 = smul.addr %s336, 8
        %s338 = scalar_lea.vmem %s0, %s337
        %p339 = scmp.lt.s32.totalorder %s26, 1
        %s340 = scalar_select %p339, %s26, 1
        %s341 = smul.addr %s340, 8
        %s342 = scalar_lea.vmem %s1, %s341
        %v343 = vld [vmem:[%s338] sm:$0xff]
        %v344 = vld [vmem:[%s2] sm:$0xff]
        %v345 = vld [vmem:[%s2 + $0x8] sm:$0xff]
        %v346 = vld [vmem:[%s2 + $0x10] sm:$0xff]
        %v347 = vld [vmem:[%s2 + $0x18] sm:$0xff]
        %v348 = vld [vmem:[%s2 + $0x20] sm:$0xff]
        %v349 = vld [vmem:[%s2 + $0x28] sm:$0xff]
        %v350 = vld [vmem:[%s2 + $0x30] sm:$0xff]
        %v351 = vld [vmem:[%s2 + $0x38] sm:$0xff]
        %v352 = vld [vmem:[%s2 + $0x40] sm:$0xff]
        %v353 = vld [vmem:[%s2 + $0x48] sm:$0xff]
        %v354 = vld [vmem:[%s2 + $0x50] sm:$0xff]
        %v355 = vld [vmem:[%s2 + $0x58] sm:$0xff]
        %v356 = vld [vmem:[%s3] sm:$0x1]
        %v358 = vlaneseq
        %v359 = vshrl.u32 %v358, 7
        %v360 = vsub.s32 0, %v359
        %v361 = vrot.slane %v356, %v360
        %vm363 = vcmask 785408
        %v365 = vsel %vm363, %v343, 0
        %367 = vmatprep.subr.mxu0 0.0
        %368 = vmatpush1.msra.mxu0 0.0
        %369 = vmatprep.subr.mxu0 0.0
        %370 = vmatpush1.msra.mxu0 0.0
        %371 = vmatprep.subr.mxu0 0.0
        %372 = vmatpush1.msra.mxu0 0.0
        %373 = vmatprep.subr.mxu0 0.0
        %374 = vmatpush1.msra.mxu0 0.0
        %375 = vmatprep.subr.mxu0 0.0
        %v376 = vand.u32 %v355, 4294901760
        %377 = vmatpush1.msra.mxu0 %v376
        %378 = vmatprep.subr.mxu0 0.0
        %v379 = vand.u32 %v354, 4294901760
        %380 = vmatpush1.msra.mxu0 %v379
        %381 = vmatprep.subr.mxu0 0.0
        %v382 = vand.u32 %v353, 4294901760
        %383 = vmatpush1.msra.mxu0 %v382
        %384 = vmatprep.subr.mxu0 0.0
        %v385 = vand.u32 %v352, 4294901760
        %386 = vmatpush1.msra.mxu0 %v385
        %387 = vmatprep.subr.mxu0 0.0
        %v388 = vand.u32 %v351, 4294901760
        %389 = vmatpush1.msra.mxu0 %v388
        %390 = vmatprep.subr.mxu0 0.0
        %v391 = vand.u32 %v350, 4294901760
        %392 = vmatpush1.msra.mxu0 %v391
        %393 = vmatprep.subr.mxu0 0.0
        %v394 = vand.u32 %v349, 4294901760
        %395 = vmatpush1.msra.mxu0 %v394
        %396 = vmatprep.subr.mxu0 0.0
        %v397 = vand.u32 %v348, 4294901760
        %398 = vmatpush1.msra.mxu0 %v397
        %399 = vmatprep.subr.mxu0 0.0
        %v400 = vand.u32 %v347, 4294901760
        %401 = vmatpush1.msra.mxu0 %v400
        %402 = vmatprep.subr.mxu0 0.0
        %v403 = vand.u32 %v346, 4294901760
        %404 = vmatpush1.msra.mxu0 %v403
        %405 = vmatprep.subr.mxu0 0.0
        %v406 = vand.u32 %v345, 4294901760
        %407 = vmatpush1.msra.mxu0 %v406
        %408 = vmatprep.subr.mxu0 0.0
        %v409 = vand.u32 %v344, 4294901760
        %410 = vmatpush1.msra.mxu0 %v409
        %411 = vmatprep.subr.mxu0 0.0
        %412 = vmatpush2.msra.mxu0 0.0
        %413 = vmatprep.subr.mxu0 0.0
        %414 = vmatpush2.msra.mxu0 0.0
        %415 = vmatprep.subr.mxu0 0.0
        %416 = vmatpush2.msra.mxu0 0.0
        %417 = vmatprep.subr.mxu0 0.0
        %418 = vmatpush2.msra.mxu0 0.0
        %419 = vmatprep.subr.mxu0 0.0
        %420 = vmatpush2.msra.mxu0 0.0
        %421 = vmatprep.subr.mxu0 0.0
        %422 = vmatpush2.msra.mxu0 0.0
        %423 = vmatprep.subr.mxu0 0.0
        %424 = vmatpush2.msra.mxu0 0.0
        %425 = vmatprep.subr.mxu0 0.0
        %426 = vmatpush2.msra.mxu0 0.0
        %427 = vmatprep.subr.mxu0 0.0
        %428 = vmatpush2.msra.mxu0 0.0
        %429 = vmatprep.subr.mxu0 0.0
        %430 = vmatpush2.msra.mxu0 0.0
        %431 = vmatprep.subr.mxu0 0.0
        %432 = vmatpush2.msra.mxu0 0.0
        %433 = vmatprep.subr.mxu0 0.0
        %434 = vmatpush2.msra.mxu0 0.0
        %435 = vmatprep.subr.mxu0 0.0
        %436 = vmatpush2.msra.mxu0 0.0
        %437 = vmatprep.subr.mxu0 0.0
        %438 = vmatpush2.msra.mxu0 0.0
        %439 = vmatprep.subr.mxu0 0.0
        %440 = vmatpush2.msra.mxu0 0.0
        %441 = vmatprep.subr.mxu0 0.0
        %442 = vmatpush2.msra.mxu0 0.0
        %443 = vmatprep.mubr.f32.mxu0 0.0
        %v444 = vand.u32 %v365, 4294901760
        %v445 = vsub.f32 %v365, %v444
        %v446 = vand.u32 %v445, 4294901760
        %v447 = vsub.f32 %v445, %v446
        %v448 = vand.u32 %v447, 4294901760
        %449 = vmatmul.mubr.f32.gmra.mxu0 %v448
        %v450 = vpop.f32.mrf.mxu0
        %v451 = vadd.f32 %v361, %v450
        %v452 = vpop.f32.mrf.mxu0
        %453 = vdwg.mxu0
        %454 = vmatprep.subr.mxu0 0.0
        %455 = vmatpush1.msra.mxu0 0.0
        %456 = vmatprep.subr.mxu0 0.0
        %457 = vmatpush1.msra.mxu0 0.0
        %458 = vmatprep.subr.mxu0 0.0
        %459 = vmatpush1.msra.mxu0 0.0
        %460 = vmatprep.subr.mxu0 0.0
        %461 = vmatpush1.msra.mxu0 0.0
        %462 = vmatprep.subr.mxu0 0.0
        %v463 = vand.u32 %v355, 4294901760
        %v464 = vsub.f32 %v355, %v463
        %v465 = vand.u32 %v464, 4294901760
        %v466 = vsub.f32 %v464, %v465
        %v467 = vand.u32 %v466, 4294901760
        %468 = vmatpush1.msra.mxu0 %v467
        %469 = vmatprep.subr.mxu0 0.0
        %v470 = vand.u32 %v354, 4294901760
        %v471 = vsub.f32 %v354, %v470
        %v472 = vand.u32 %v471, 4294901760
        %v473 = vsub.f32 %v471, %v472
        %v474 = vand.u32 %v473, 4294901760
        %475 = vmatpush1.msra.mxu0 %v474
        %476 = vmatprep.subr.mxu0 0.0
        %v477 = vand.u32 %v353, 4294901760
        %v478 = vsub.f32 %v353, %v477
        %v479 = vand.u32 %v478, 4294901760
        %v480 = vsub.f32 %v478, %v479
        %v481 = vand.u32 %v480, 4294901760
        %482 = vmatpush1.msra.mxu0 %v481
        %483 = vmatprep.subr.mxu0 0.0
        %v484 = vand.u32 %v352, 4294901760
        %v485 = vsub.f32 %v352, %v484
        %v486 = vand.u32 %v485, 4294901760
        %v487 = vsub.f32 %v485, %v486
        %v488 = vand.u32 %v487, 4294901760
        %489 = vmatpush1.msra.mxu0 %v488
        %490 = vmatprep.subr.mxu0 0.0
        %v491 = vand.u32 %v351, 4294901760
        %v492 = vsub.f32 %v351, %v491
        %v493 = vand.u32 %v492, 4294901760
        %v494 = vsub.f32 %v492, %v493
        %v495 = vand.u32 %v494, 4294901760
        %496 = vmatpush1.msra.mxu0 %v495
        %497 = vmatprep.subr.mxu0 0.0
        %v498 = vand.u32 %v350, 4294901760
        %v499 = vsub.f32 %v350, %v498
        %v500 = vand.u32 %v499, 4294901760
        %v501 = vsub.f32 %v499, %v500
        %v502 = vand.u32 %v501, 4294901760
        %503 = vmatpush1.msra.mxu0 %v502
        %504 = vmatprep.subr.mxu0 0.0
        %v505 = vand.u32 %v349, 4294901760
        %v506 = vsub.f32 %v349, %v505
        %v507 = vand.u32 %v506, 4294901760
        %v508 = vsub.f32 %v506, %v507
        %v509 = vand.u32 %v508, 4294901760
        %510 = vmatpush1.msra.mxu0 %v509
        %511 = vmatprep.subr.mxu0 0.0
        %v512 = vand.u32 %v348, 4294901760
        %v513 = vsub.f32 %v348, %v512
        %v514 = vand.u32 %v513, 4294901760
        %v515 = vsub.f32 %v513, %v514
        %v516 = vand.u32 %v515, 4294901760
        %517 = vmatpush1.msra.mxu0 %v516
        %518 = vmatprep.subr.mxu0 0.0
        %v519 = vand.u32 %v347, 4294901760
        %v520 = vsub.f32 %v347, %v519
        %v521 = vand.u32 %v520, 4294901760
        %v522 = vsub.f32 %v520, %v521
        %v523 = vand.u32 %v522, 4294901760
        %524 = vmatpush1.msra.mxu0 %v523
        %525 = vmatprep.subr.mxu0 0.0
        %v526 = vand.u32 %v346, 4294901760
        %v527 = vsub.f32 %v346, %v526
        %v528 = vand.u32 %v527, 4294901760
        %v529 = vsub.f32 %v527, %v528
        %v530 = vand.u32 %v529, 4294901760
        %531 = vmatpush1.msra.mxu0 %v530
        %532 = vmatprep.subr.mxu0 0.0
        %v533 = vand.u32 %v345, 4294901760
        %v534 = vsub.f32 %v345, %v533
        %v535 = vand.u32 %v534, 4294901760
        %v536 = vsub.f32 %v534, %v535
        %v537 = vand.u32 %v536, 4294901760
        %538 = vmatpush1.msra.mxu0 %v537
        %539 = vmatprep.subr.mxu0 0.0
        %v540 = vand.u32 %v344, 4294901760
        %v541 = vsub.f32 %v344, %v540
        %v542 = vand.u32 %v541, 4294901760
        %v543 = vsub.f32 %v541, %v542
        %v544 = vand.u32 %v543, 4294901760
        %545 = vmatpush1.msra.mxu0 %v544
        %546 = vmatprep.subr.mxu0 0.0
        %547 = vmatpush2.msra.mxu0 0.0
        %548 = vmatprep.subr.mxu0 0.0
        %549 = vmatpush2.msra.mxu0 0.0
        %550 = vmatprep.subr.mxu0 0.0
        %551 = vmatpush2.msra.mxu0 0.0
        %552 = vmatprep.subr.mxu0 0.0
        %553 = vmatpush2.msra.mxu0 0.0
        %554 = vmatprep.subr.mxu0 0.0
        %555 = vmatpush2.msra.mxu0 0.0
        %556 = vmatprep.subr.mxu0 0.0
        %557 = vmatpush2.msra.mxu0 0.0
        %558 = vmatprep.subr.mxu0 0.0
        %559 = vmatpush2.msra.mxu0 0.0
        %560 = vmatprep.subr.mxu0 0.0
        %561 = vmatpush2.msra.mxu0 0.0
        %562 = vmatprep.subr.mxu0 0.0
        %563 = vmatpush2.msra.mxu0 0.0
        %564 = vmatprep.subr.mxu0 0.0
        %565 = vmatpush2.msra.mxu0 0.0
        %566 = vmatprep.subr.mxu0 0.0
        %567 = vmatpush2.msra.mxu0 0.0
        %568 = vmatprep.subr.mxu0 0.0
        %569 = vmatpush2.msra.mxu0 0.0
        %570 = vmatprep.subr.mxu0 0.0
        %571 = vmatpush2.msra.mxu0 0.0
        %572 = vmatprep.subr.mxu0 0.0
        %573 = vmatpush2.msra.mxu0 0.0
        %574 = vmatprep.subr.mxu0 0.0
        %575 = vmatpush2.msra.mxu0 0.0
        %576 = vmatprep.subr.mxu0 0.0
        %577 = vmatpush2.msra.mxu0 0.0
        %578 = vmatprep.mubr.f32.mxu0 0.0
        %v579 = vand.u32 %v365, 4294901760
        %580 = vmatmul.mubr.f32.gmra.mxu0 %v579
        %v581 = vpop.f32.mrf.mxu0
        %v582 = vadd.f32 %v451, %v581
        %v583 = vpop.f32.mrf.mxu0
        %584 = vdwg.mxu0
        %585 = vmatprep.subr.mxu0 0.0
        %586 = vmatpush1.msra.mxu0 0.0
        %587 = vmatprep.subr.mxu0 0.0
        %588 = vmatpush1.msra.mxu0 0.0
        %589 = vmatprep.subr.mxu0 0.0
        %590 = vmatpush1.msra.mxu0 0.0
        %591 = vmatprep.subr.mxu0 0.0
        %592 = vmatpush1.msra.mxu0 0.0
        %593 = vmatprep.subr.mxu0 0.0
        %v594 = vand.u32 %v355, 4294901760
        %v595 = vsub.f32 %v355, %v594
        %596 = vmatpush1.msra.mxu0 %v595
        %597 = vmatprep.subr.mxu0 0.0
        %v598 = vand.u32 %v354, 4294901760
        %v599 = vsub.f32 %v354, %v598
        %600 = vmatpush1.msra.mxu0 %v599
        %601 = vmatprep.subr.mxu0 0.0
        %v602 = vand.u32 %v353, 4294901760
        %v603 = vsub.f32 %v353, %v602
        %604 = vmatpush1.msra.mxu0 %v603
        %605 = vmatprep.subr.mxu0 0.0
        %v606 = vand.u32 %v352, 4294901760
        %v607 = vsub.f32 %v352, %v606
        %608 = vmatpush1.msra.mxu0 %v607
        %609 = vmatprep.subr.mxu0 0.0
        %v610 = vand.u32 %v351, 4294901760
        %v611 = vsub.f32 %v351, %v610
        %612 = vmatpush1.msra.mxu0 %v611
        %613 = vmatprep.subr.mxu0 0.0
        %v614 = vand.u32 %v350, 4294901760
        %v615 = vsub.f32 %v350, %v614
        %616 = vmatpush1.msra.mxu0 %v615
        %617 = vmatprep.subr.mxu0 0.0
        %v618 = vand.u32 %v349, 4294901760
        %v619 = vsub.f32 %v349, %v618
        %620 = vmatpush1.msra.mxu0 %v619
        %621 = vmatprep.subr.mxu0 0.0
        %v622 = vand.u32 %v348, 4294901760
        %v623 = vsub.f32 %v348, %v622
        %624 = vmatpush1.msra.mxu0 %v623
        %625 = vmatprep.subr.mxu0 0.0
        %v626 = vand.u32 %v347, 4294901760
        %v627 = vsub.f32 %v347, %v626
        %628 = vmatpush1.msra.mxu0 %v627
        %629 = vmatprep.subr.mxu0 0.0
        %v630 = vand.u32 %v346, 4294901760
        %v631 = vsub.f32 %v346, %v630
        %632 = vmatpush1.msra.mxu0 %v631
        %633 = vmatprep.subr.mxu0 0.0
        %v634 = vand.u32 %v345, 4294901760
        %v635 = vsub.f32 %v345, %v634
        %636 = vmatpush1.msra.mxu0 %v635
        %637 = vmatprep.subr.mxu0 0.0
        %v638 = vand.u32 %v344, 4294901760
        %v639 = vsub.f32 %v344, %v638
        %640 = vmatpush1.msra.mxu0 %v639
        %641 = vmatprep.subr.mxu0 0.0
        %642 = vmatpush2.msra.mxu0 0.0
        %643 = vmatprep.subr.mxu0 0.0
        %644 = vmatpush2.msra.mxu0 0.0
        %645 = vmatprep.subr.mxu0 0.0
        %646 = vmatpush2.msra.mxu0 0.0
        %647 = vmatprep.subr.mxu0 0.0
        %648 = vmatpush2.msra.mxu0 0.0
        %649 = vmatprep.subr.mxu0 0.0
        %650 = vmatpush2.msra.mxu0 0.0
        %651 = vmatprep.subr.mxu0 0.0
        %652 = vmatpush2.msra.mxu0 0.0
        %653 = vmatprep.subr.mxu0 0.0
        %654 = vmatpush2.msra.mxu0 0.0
        %655 = vmatprep.subr.mxu0 0.0
        %656 = vmatpush2.msra.mxu0 0.0
        %657 = vmatprep.subr.mxu0 0.0
        %658 = vmatpush2.msra.mxu0 0.0
        %659 = vmatprep.subr.mxu0 0.0
        %660 = vmatpush2.msra.mxu0 0.0
        %661 = vmatprep.subr.mxu0 0.0
        %662 = vmatpush2.msra.mxu0 0.0
        %663 = vmatprep.subr.mxu0 0.0
        %664 = vmatpush2.msra.mxu0 0.0
        %665 = vmatprep.subr.mxu0 0.0
        %666 = vmatpush2.msra.mxu0 0.0
        %667 = vmatprep.subr.mxu0 0.0
        %668 = vmatpush2.msra.mxu0 0.0
        %669 = vmatprep.subr.mxu0 0.0
        %670 = vmatpush2.msra.mxu0 0.0
        %671 = vmatprep.subr.mxu0 0.0
        %672 = vmatpush2.msra.mxu0 0.0
        %673 = vmatprep.mubr.f32.mxu0 0.0
        %v674 = vand.u32 %v365, 4294901760
        %v675 = vsub.f32 %v365, %v674
        %676 = vmatmul.mubr.f32.gmra.mxu0 %v675
        %v677 = vpop.f32.mrf.mxu0
        %v678 = vadd.f32 %v582, %v677
        %v679 = vpop.f32.mrf.mxu0
        %680 = vdwg.mxu0
        %681 = vmatprep.subr.mxu0 0.0
        %682 = vmatpush1.msra.mxu0 0.0
        %683 = vmatprep.subr.mxu0 0.0
        %684 = vmatpush1.msra.mxu0 0.0
        %685 = vmatprep.subr.mxu0 0.0
        %686 = vmatpush1.msra.mxu0 0.0
        %687 = vmatprep.subr.mxu0 0.0
        %688 = vmatpush1.msra.mxu0 0.0
        %689 = vmatprep.subr.mxu0 0.0
        %v690 = vand.u32 %v355, 4294901760
        %691 = vmatpush1.msra.mxu0 %v690
        %692 = vmatprep.subr.mxu0 0.0
        %v693 = vand.u32 %v354, 4294901760
        %694 = vmatpush1.msra.mxu0 %v693
        %695 = vmatprep.subr.mxu0 0.0
        %v696 = vand.u32 %v353, 4294901760
        %697 = vmatpush1.msra.mxu0 %v696
        %698 = vmatprep.subr.mxu0 0.0
        %v699 = vand.u32 %v352, 4294901760
        %700 = vmatpush1.msra.mxu0 %v699
        %701 = vmatprep.subr.mxu0 0.0
        %v702 = vand.u32 %v351, 4294901760
        %703 = vmatpush1.msra.mxu0 %v702
        %704 = vmatprep.subr.mxu0 0.0
        %v705 = vand.u32 %v350, 4294901760
        %706 = vmatpush1.msra.mxu0 %v705
        %707 = vmatprep.subr.mxu0 0.0
        %v708 = vand.u32 %v349, 4294901760
        %709 = vmatpush1.msra.mxu0 %v708
        %710 = vmatprep.subr.mxu0 0.0
        %v711 = vand.u32 %v348, 4294901760
        %712 = vmatpush1.msra.mxu0 %v711
        %713 = vmatprep.subr.mxu0 0.0
        %v714 = vand.u32 %v347, 4294901760
        %715 = vmatpush1.msra.mxu0 %v714
        %716 = vmatprep.subr.mxu0 0.0
        %v717 = vand.u32 %v346, 4294901760
        %718 = vmatpush1.msra.mxu0 %v717
        %719 = vmatprep.subr.mxu0 0.0
        %v720 = vand.u32 %v345, 4294901760
        %721 = vmatpush1.msra.mxu0 %v720
        %722 = vmatprep.subr.mxu0 0.0
        %v723 = vand.u32 %v344, 4294901760
        %724 = vmatpush1.msra.mxu0 %v723
        %725 = vmatprep.subr.mxu0 0.0
        %726 = vmatpush2.msra.mxu0 0.0
        %727 = vmatprep.subr.mxu0 0.0
        %728 = vmatpush2.msra.mxu0 0.0
        %729 = vmatprep.subr.mxu0 0.0
        %730 = vmatpush2.msra.mxu0 0.0
        %731 = vmatprep.subr.mxu0 0.0
        %732 = vmatpush2.msra.mxu0 0.0
        %733 = vmatprep.subr.mxu0 0.0
        %734 = vmatpush2.msra.mxu0 0.0
        %735 = vmatprep.subr.mxu0 0.0
        %736 = vmatpush2.msra.mxu0 0.0
        %737 = vmatprep.subr.mxu0 0.0
        %738 = vmatpush2.msra.mxu0 0.0
        %739 = vmatprep.subr.mxu0 0.0
        %740 = vmatpush2.msra.mxu0 0.0
        %741 = vmatprep.subr.mxu0 0.0
        %742 = vmatpush2.msra.mxu0 0.0
        %743 = vmatprep.subr.mxu0 0.0
        %744 = vmatpush2.msra.mxu0 0.0
        %745 = vmatprep.subr.mxu0 0.0
        %746 = vmatpush2.msra.mxu0 0.0
        %747 = vmatprep.subr.mxu0 0.0
        %748 = vmatpush2.msra.mxu0 0.0
        %749 = vmatprep.subr.mxu0 0.0
        %750 = vmatpush2.msra.mxu0 0.0
        %751 = vmatprep.subr.mxu0 0.0
        %752 = vmatpush2.msra.mxu0 0.0
        %753 = vmatprep.subr.mxu0 0.0
        %754 = vmatpush2.msra.mxu0 0.0
        %755 = vmatprep.subr.mxu0 0.0
        %756 = vmatpush2.msra.mxu0 0.0
        %757 = vmatprep.mubr.f32.mxu0 0.0
        %v758 = vand.u32 %v365, 4294901760
        %v759 = vsub.f32 %v365, %v758
        %v760 = vand.u32 %v759, 4294901760
        %761 = vmatmul.mubr.f32.gmra.mxu0 %v760
        %v762 = vpop.f32.mrf.mxu0
        %v763 = vadd.f32 %v678, %v762
        %v764 = vpop.f32.mrf.mxu0
        %765 = vdwg.mxu0
        %766 = vmatprep.subr.mxu0 0.0
        %767 = vmatpush1.msra.mxu0 0.0
        %768 = vmatprep.subr.mxu0 0.0
        %769 = vmatpush1.msra.mxu0 0.0
        %770 = vmatprep.subr.mxu0 0.0
        %771 = vmatpush1.msra.mxu0 0.0
        %772 = vmatprep.subr.mxu0 0.0
        %773 = vmatpush1.msra.mxu0 0.0
        %774 = vmatprep.subr.mxu0 0.0
        %v775 = vand.u32 %v355, 4294901760
        %v776 = vsub.f32 %v355, %v775
        %v777 = vand.u32 %v776, 4294901760
        %778 = vmatpush1.msra.mxu0 %v777
        %779 = vmatprep.subr.mxu0 0.0
        %v780 = vand.u32 %v354, 4294901760
        %v781 = vsub.f32 %v354, %v780
        %v782 = vand.u32 %v781, 4294901760
        %783 = vmatpush1.msra.mxu0 %v782
        %784 = vmatprep.subr.mxu0 0.0
        %v785 = vand.u32 %v353, 4294901760
        %v786 = vsub.f32 %v353, %v785
        %v787 = vand.u32 %v786, 4294901760
        %788 = vmatpush1.msra.mxu0 %v787
        %789 = vmatprep.subr.mxu0 0.0
        %v790 = vand.u32 %v352, 4294901760
        %v791 = vsub.f32 %v352, %v790
        %v792 = vand.u32 %v791, 4294901760
        %793 = vmatpush1.msra.mxu0 %v792
        %794 = vmatprep.subr.mxu0 0.0
        %v795 = vand.u32 %v351, 4294901760
        %v796 = vsub.f32 %v351, %v795
        %v797 = vand.u32 %v796, 4294901760
        %798 = vmatpush1.msra.mxu0 %v797
        %799 = vmatprep.subr.mxu0 0.0
        %v800 = vand.u32 %v350, 4294901760
        %v801 = vsub.f32 %v350, %v800
        %v802 = vand.u32 %v801, 4294901760
        %803 = vmatpush1.msra.mxu0 %v802
        %804 = vmatprep.subr.mxu0 0.0
        %v805 = vand.u32 %v349, 4294901760
        %v806 = vsub.f32 %v349, %v805
        %v807 = vand.u32 %v806, 4294901760
        %808 = vmatpush1.msra.mxu0 %v807
        %809 = vmatprep.subr.mxu0 0.0
        %v810 = vand.u32 %v348, 4294901760
        %v811 = vsub.f32 %v348, %v810
        %v812 = vand.u32 %v811, 4294901760
        %813 = vmatpush1.msra.mxu0 %v812
        %814 = vmatprep.subr.mxu0 0.0
        %v815 = vand.u32 %v347, 4294901760
        %v816 = vsub.f32 %v347, %v815
        %v817 = vand.u32 %v816, 4294901760
        %818 = vmatpush1.msra.mxu0 %v817
        %819 = vmatprep.subr.mxu0 0.0
        %v820 = vand.u32 %v346, 4294901760
        %v821 = vsub.f32 %v346, %v820
        %v822 = vand.u32 %v821, 4294901760
        %823 = vmatpush1.msra.mxu0 %v822
        %824 = vmatprep.subr.mxu0 0.0
        %v825 = vand.u32 %v345, 4294901760
        %v826 = vsub.f32 %v345, %v825
        %v827 = vand.u32 %v826, 4294901760
        %828 = vmatpush1.msra.mxu0 %v827
        %829 = vmatprep.subr.mxu0 0.0
        %v830 = vand.u32 %v344, 4294901760
        %v831 = vsub.f32 %v344, %v830
        %v832 = vand.u32 %v831, 4294901760
        %833 = vmatpush1.msra.mxu0 %v832
        %834 = vmatprep.subr.mxu0 0.0
        %835 = vmatpush2.msra.mxu0 0.0
        %836 = vmatprep.subr.mxu0 0.0
        %837 = vmatpush2.msra.mxu0 0.0
        %838 = vmatprep.subr.mxu0 0.0
        %839 = vmatpush2.msra.mxu0 0.0
        %840 = vmatprep.subr.mxu0 0.0
        %841 = vmatpush2.msra.mxu0 0.0
        %842 = vmatprep.subr.mxu0 0.0
        %843 = vmatpush2.msra.mxu0 0.0
        %844 = vmatprep.subr.mxu0 0.0
        %845 = vmatpush2.msra.mxu0 0.0
        %846 = vmatprep.subr.mxu0 0.0
        %847 = vmatpush2.msra.mxu0 0.0
        %848 = vmatprep.subr.mxu0 0.0
        %849 = vmatpush2.msra.mxu0 0.0
        %850 = vmatprep.subr.mxu0 0.0
        %851 = vmatpush2.msra.mxu0 0.0
        %852 = vmatprep.subr.mxu0 0.0
        %853 = vmatpush2.msra.mxu0 0.0
        %854 = vmatprep.subr.mxu0 0.0
        %855 = vmatpush2.msra.mxu0 0.0
        %856 = vmatprep.subr.mxu0 0.0
        %857 = vmatpush2.msra.mxu0 0.0
        %858 = vmatprep.subr.mxu0 0.0
        %859 = vmatpush2.msra.mxu0 0.0
        %860 = vmatprep.subr.mxu0 0.0
        %861 = vmatpush2.msra.mxu0 0.0
        %862 = vmatprep.subr.mxu0 0.0
        %863 = vmatpush2.msra.mxu0 0.0
        %864 = vmatprep.subr.mxu0 0.0
        %865 = vmatpush2.msra.mxu0 0.0
        %866 = vmatprep.mubr.f32.mxu0 0.0
        %v867 = vand.u32 %v365, 4294901760
        %868 = vmatmul.mubr.f32.gmra.mxu0 %v867
        %v869 = vpop.f32.mrf.mxu0
        %v870 = vadd.f32 %v763, %v869
        %v871 = vpop.f32.mrf.mxu0
        %872 = vdwg.mxu0
        %873 = vmatprep.subr.mxu0 0.0
        %874 = vmatpush1.msra.mxu0 0.0
        %875 = vmatprep.subr.mxu0 0.0
        %876 = vmatpush1.msra.mxu0 0.0
        %877 = vmatprep.subr.mxu0 0.0
        %878 = vmatpush1.msra.mxu0 0.0
        %879 = vmatprep.subr.mxu0 0.0
        %880 = vmatpush1.msra.mxu0 0.0
        %881 = vmatprep.subr.mxu0 0.0
        %v882 = vand.u32 %v355, 4294901760
        %883 = vmatpush1.msra.mxu0 %v882
        %884 = vmatprep.subr.mxu0 0.0
        %v885 = vand.u32 %v354, 4294901760
        %886 = vmatpush1.msra.mxu0 %v885
        %887 = vmatprep.subr.mxu0 0.0
        %v888 = vand.u32 %v353, 4294901760
        %889 = vmatpush1.msra.mxu0 %v888
        %890 = vmatprep.subr.mxu0 0.0
        %v891 = vand.u32 %v352, 4294901760
        %892 = vmatpush1.msra.mxu0 %v891
        %893 = vmatprep.subr.mxu0 0.0
        %v894 = vand.u32 %v351, 4294901760
        %895 = vmatpush1.msra.mxu0 %v894
        %896 = vmatprep.subr.mxu0 0.0
        %v897 = vand.u32 %v350, 4294901760
        %898 = vmatpush1.msra.mxu0 %v897
        %899 = vmatprep.subr.mxu0 0.0
        %v900 = vand.u32 %v349, 4294901760
        %901 = vmatpush1.msra.mxu0 %v900
        %902 = vmatprep.subr.mxu0 0.0
        %v903 = vand.u32 %v348, 4294901760
        %904 = vmatpush1.msra.mxu0 %v903
        %905 = vmatprep.subr.mxu0 0.0
        %v906 = vand.u32 %v347, 4294901760
        %907 = vmatpush1.msra.mxu0 %v906
        %908 = vmatprep.subr.mxu0 0.0
        %v909 = vand.u32 %v346, 4294901760
        %910 = vmatpush1.msra.mxu0 %v909
        %911 = vmatprep.subr.mxu0 0.0
        %v912 = vand.u32 %v345, 4294901760
        %913 = vmatpush1.msra.mxu0 %v912
        %914 = vmatprep.subr.mxu0 0.0
        %v915 = vand.u32 %v344, 4294901760
        %916 = vmatpush1.msra.mxu0 %v915
        %917 = vmatprep.subr.mxu0 0.0
        %918 = vmatpush2.msra.mxu0 0.0
        %919 = vmatprep.subr.mxu0 0.0
        %920 = vmatpush2.msra.mxu0 0.0
        %921 = vmatprep.subr.mxu0 0.0
        %922 = vmatpush2.msra.mxu0 0.0
        %923 = vmatprep.subr.mxu0 0.0
        %924 = vmatpush2.msra.mxu0 0.0
        %925 = vmatprep.subr.mxu0 0.0
        %926 = vmatpush2.msra.mxu0 0.0
        %927 = vmatprep.subr.mxu0 0.0
        %928 = vmatpush2.msra.mxu0 0.0
        %929 = vmatprep.subr.mxu0 0.0
        %930 = vmatpush2.msra.mxu0 0.0
        %931 = vmatprep.subr.mxu0 0.0
        %932 = vmatpush2.msra.mxu0 0.0
        %933 = vmatprep.subr.mxu0 0.0
        %934 = vmatpush2.msra.mxu0 0.0
        %935 = vmatprep.subr.mxu0 0.0
        %936 = vmatpush2.msra.mxu0 0.0
        %937 = vmatprep.subr.mxu0 0.0
        %938 = vmatpush2.msra.mxu0 0.0
        %939 = vmatprep.subr.mxu0 0.0
        %940 = vmatpush2.msra.mxu0 0.0
        %941 = vmatprep.subr.mxu0 0.0
        %942 = vmatpush2.msra.mxu0 0.0
        %943 = vmatprep.subr.mxu0 0.0
        %944 = vmatpush2.msra.mxu0 0.0
        %945 = vmatprep.subr.mxu0 0.0
        %946 = vmatpush2.msra.mxu0 0.0
        %947 = vmatprep.subr.mxu0 0.0
        %948 = vmatpush2.msra.mxu0 0.0
        %949 = vmatprep.mubr.f32.mxu0 0.0
        %v950 = vand.u32 %v365, 4294901760
        %951 = vmatmul.mubr.f32.gmra.mxu0 %v950
        %v952 = vpop.f32.mrf.mxu0
        %v953 = vadd.f32 %v870, %v952
        %v954 = vpop.f32.mrf.mxu0
        %955 = vdwg.mxu0
        %v956 = vld [vmem:[%s342] sm:$0xff]
        %v957 = vld [vmem:[%s4] sm:$0xff]
        %v958 = vld [vmem:[%s4 + $0x8] sm:$0xff]
        %v959 = vld [vmem:[%s4 + $0x10] sm:$0xff]
        %v960 = vld [vmem:[%s4 + $0x18] sm:$0xff]
        %v961 = vld [vmem:[%s5] sm:$0x1]
        %v963 = vlaneseq
        %v964 = vshrl.u32 %v963, 7
        %v965 = vsub.s32 0, %v964
        %v966 = vrot.slane %v961, %v965
        %vm968 = vcmask 261120
        %v970 = vsel %vm968, %v956, 0
        %972 = vmatprep.subr.mxu0 0.0
        %973 = vmatpush1.msra.mxu0 0.0
        %974 = vmatprep.subr.mxu0 0.0
        %975 = vmatpush1.msra.mxu0 0.0
        %976 = vmatprep.subr.mxu0 0.0
        %977 = vmatpush1.msra.mxu0 0.0
        %978 = vmatprep.subr.mxu0 0.0
        %979 = vmatpush1.msra.mxu0 0.0
        %980 = vmatprep.subr.mxu0 0.0
        %981 = vmatpush1.msra.mxu0 0.0
        %982 = vmatprep.subr.mxu0 0.0
        %983 = vmatpush1.msra.mxu0 0.0
        %984 = vmatprep.subr.mxu0 0.0
        %985 = vmatpush1.msra.mxu0 0.0
        %986 = vmatprep.subr.mxu0 0.0
        %987 = vmatpush1.msra.mxu0 0.0
        %988 = vmatprep.subr.mxu0 0.0
        %989 = vmatpush1.msra.mxu0 0.0
        %990 = vmatprep.subr.mxu0 0.0
        %991 = vmatpush1.msra.mxu0 0.0
        %992 = vmatprep.subr.mxu0 0.0
        %993 = vmatpush1.msra.mxu0 0.0
        %994 = vmatprep.subr.mxu0 0.0
        %995 = vmatpush1.msra.mxu0 0.0
        %996 = vmatprep.subr.mxu0 0.0
        %v997 = vand.u32 %v960, 4294901760
        %998 = vmatpush1.msra.mxu0 %v997
        %999 = vmatprep.subr.mxu0 0.0
        %v1000 = vand.u32 %v959, 4294901760
        %1001 = vmatpush1.msra.mxu0 %v1000
        %1002 = vmatprep.subr.mxu0 0.0
        %v1003 = vand.u32 %v958, 4294901760
        %1004 = vmatpush1.msra.mxu0 %v1003
        %1005 = vmatprep.subr.mxu0 0.0
        %v1006 = vand.u32 %v957, 4294901760
        %1007 = vmatpush1.msra.mxu0 %v1006
        %1008 = vmatprep.subr.mxu0 0.0
        %1009 = vmatpush2.msra.mxu0 0.0
        %1010 = vmatprep.subr.mxu0 0.0
        %1011 = vmatpush2.msra.mxu0 0.0
        %1012 = vmatprep.subr.mxu0 0.0
        %1013 = vmatpush2.msra.mxu0 0.0
        %1014 = vmatprep.subr.mxu0 0.0
        %1015 = vmatpush2.msra.mxu0 0.0
        %1016 = vmatprep.subr.mxu0 0.0
        %1017 = vmatpush2.msra.mxu0 0.0
        %1018 = vmatprep.subr.mxu0 0.0
        %1019 = vmatpush2.msra.mxu0 0.0
        %1020 = vmatprep.subr.mxu0 0.0
        %1021 = vmatpush2.msra.mxu0 0.0
        %1022 = vmatprep.subr.mxu0 0.0
        %1023 = vmatpush2.msra.mxu0 0.0
        %1024 = vmatprep.subr.mxu0 0.0
        %1025 = vmatpush2.msra.mxu0 0.0
        %1026 = vmatprep.subr.mxu0 0.0
        %1027 = vmatpush2.msra.mxu0 0.0
        %1028 = vmatprep.subr.mxu0 0.0
        %1029 = vmatpush2.msra.mxu0 0.0
        %1030 = vmatprep.subr.mxu0 0.0
        %1031 = vmatpush2.msra.mxu0 0.0
        %1032 = vmatprep.subr.mxu0 0.0
        %1033 = vmatpush2.msra.mxu0 0.0
        %1034 = vmatprep.subr.mxu0 0.0
        %1035 = vmatpush2.msra.mxu0 0.0
        %1036 = vmatprep.subr.mxu0 0.0
        %1037 = vmatpush2.msra.mxu0 0.0
        %1038 = vmatprep.subr.mxu0 0.0
        %1039 = vmatpush2.msra.mxu0 0.0
        %1040 = vmatprep.mubr.f32.mxu0 0.0
        %v1041 = vand.u32 %v970, 4294901760
        %v1042 = vsub.f32 %v970, %v1041
        %v1043 = vand.u32 %v1042, 4294901760
        %v1044 = vsub.f32 %v1042, %v1043
        %v1045 = vand.u32 %v1044, 4294901760
        %1046 = vmatmul.mubr.f32.gmra.mxu0 %v1045
        %v1047 = vpop.f32.mrf.mxu0
        %v1048 = vadd.f32 %v966, %v1047
        %v1049 = vpop.f32.mrf.mxu0
        %1050 = vdwg.mxu0
        %1051 = vmatprep.subr.mxu0 0.0
        %1052 = vmatpush1.msra.mxu0 0.0
        %1053 = vmatprep.subr.mxu0 0.0
        %1054 = vmatpush1.msra.mxu0 0.0
        %1055 = vmatprep.subr.mxu0 0.0
        %1056 = vmatpush1.msra.mxu0 0.0
        %1057 = vmatprep.subr.mxu0 0.0
        %1058 = vmatpush1.msra.mxu0 0.0
        %1059 = vmatprep.subr.mxu0 0.0
        %1060 = vmatpush1.msra.mxu0 0.0
        %1061 = vmatprep.subr.mxu0 0.0
        %1062 = vmatpush1.msra.mxu0 0.0
        %1063 = vmatprep.subr.mxu0 0.0
        %1064 = vmatpush1.msra.mxu0 0.0
        %1065 = vmatprep.subr.mxu0 0.0
        %1066 = vmatpush1.msra.mxu0 0.0
        %1067 = vmatprep.subr.mxu0 0.0
        %1068 = vmatpush1.msra.mxu0 0.0
        %1069 = vmatprep.subr.mxu0 0.0
        %1070 = vmatpush1.msra.mxu0 0.0
        %1071 = vmatprep.subr.mxu0 0.0
        %1072 = vmatpush1.msra.mxu0 0.0
        %1073 = vmatprep.subr.mxu0 0.0
        %1074 = vmatpush1.msra.mxu0 0.0
        %1075 = vmatprep.subr.mxu0 0.0
        %v1076 = vand.u32 %v960, 4294901760
        %v1077 = vsub.f32 %v960, %v1076
        %v1078 = vand.u32 %v1077, 4294901760
        %v1079 = vsub.f32 %v1077, %v1078
        %v1080 = vand.u32 %v1079, 4294901760
        %1081 = vmatpush1.msra.mxu0 %v1080
        %1082 = vmatprep.subr.mxu0 0.0
        %v1083 = vand.u32 %v959, 4294901760
        %v1084 = vsub.f32 %v959, %v1083
        %v1085 = vand.u32 %v1084, 4294901760
        %v1086 = vsub.f32 %v1084, %v1085
        %v1087 = vand.u32 %v1086, 4294901760
        %1088 = vmatpush1.msra.mxu0 %v1087
        %1089 = vmatprep.subr.mxu0 0.0
        %v1090 = vand.u32 %v958, 4294901760
        %v1091 = vsub.f32 %v958, %v1090
        %v1092 = vand.u32 %v1091, 4294901760
        %v1093 = vsub.f32 %v1091, %v1092
        %v1094 = vand.u32 %v1093, 4294901760
        %1095 = vmatpush1.msra.mxu0 %v1094
        %1096 = vmatprep.subr.mxu0 0.0
        %v1097 = vand.u32 %v957, 4294901760
        %v1098 = vsub.f32 %v957, %v1097
        %v1099 = vand.u32 %v1098, 4294901760
        %v1100 = vsub.f32 %v1098, %v1099
        %v1101 = vand.u32 %v1100, 4294901760
        %1102 = vmatpush1.msra.mxu0 %v1101
        %1103 = vmatprep.subr.mxu0 0.0
        %1104 = vmatpush2.msra.mxu0 0.0
        %1105 = vmatprep.subr.mxu0 0.0
        %1106 = vmatpush2.msra.mxu0 0.0
        %1107 = vmatprep.subr.mxu0 0.0
        %1108 = vmatpush2.msra.mxu0 0.0
        %1109 = vmatprep.subr.mxu0 0.0
        %1110 = vmatpush2.msra.mxu0 0.0
        %1111 = vmatprep.subr.mxu0 0.0
        %1112 = vmatpush2.msra.mxu0 0.0
        %1113 = vmatprep.subr.mxu0 0.0
        %1114 = vmatpush2.msra.mxu0 0.0
        %1115 = vmatprep.subr.mxu0 0.0
        %1116 = vmatpush2.msra.mxu0 0.0
        %1117 = vmatprep.subr.mxu0 0.0
        %1118 = vmatpush2.msra.mxu0 0.0
        %1119 = vmatprep.subr.mxu0 0.0
        %1120 = vmatpush2.msra.mxu0 0.0
        %1121 = vmatprep.subr.mxu0 0.0
        %1122 = vmatpush2.msra.mxu0 0.0
        %1123 = vmatprep.subr.mxu0 0.0
        %1124 = vmatpush2.msra.mxu0 0.0
        %1125 = vmatprep.subr.mxu0 0.0
        %1126 = vmatpush2.msra.mxu0 0.0
        %1127 = vmatprep.subr.mxu0 0.0
        %1128 = vmatpush2.msra.mxu0 0.0
        %1129 = vmatprep.subr.mxu0 0.0
        %1130 = vmatpush2.msra.mxu0 0.0
        %1131 = vmatprep.subr.mxu0 0.0
        %1132 = vmatpush2.msra.mxu0 0.0
        %1133 = vmatprep.subr.mxu0 0.0
        %1134 = vmatpush2.msra.mxu0 0.0
        %1135 = vmatprep.mubr.f32.mxu0 0.0
        %v1136 = vand.u32 %v970, 4294901760
        %1137 = vmatmul.mubr.f32.gmra.mxu0 %v1136
        %v1138 = vpop.f32.mrf.mxu0
        %v1139 = vadd.f32 %v1048, %v1138
        %v1140 = vpop.f32.mrf.mxu0
        %1141 = vdwg.mxu0
        %1142 = vmatprep.subr.mxu0 0.0
        %1143 = vmatpush1.msra.mxu0 0.0
        %1144 = vmatprep.subr.mxu0 0.0
        %1145 = vmatpush1.msra.mxu0 0.0
        %1146 = vmatprep.subr.mxu0 0.0
        %1147 = vmatpush1.msra.mxu0 0.0
        %1148 = vmatprep.subr.mxu0 0.0
        %1149 = vmatpush1.msra.mxu0 0.0
        %1150 = vmatprep.subr.mxu0 0.0
        %1151 = vmatpush1.msra.mxu0 0.0
        %1152 = vmatprep.subr.mxu0 0.0
        %1153 = vmatpush1.msra.mxu0 0.0
        %1154 = vmatprep.subr.mxu0 0.0
        %1155 = vmatpush1.msra.mxu0 0.0
        %1156 = vmatprep.subr.mxu0 0.0
        %1157 = vmatpush1.msra.mxu0 0.0
        %1158 = vmatprep.subr.mxu0 0.0
        %1159 = vmatpush1.msra.mxu0 0.0
        %1160 = vmatprep.subr.mxu0 0.0
        %1161 = vmatpush1.msra.mxu0 0.0
        %1162 = vmatprep.subr.mxu0 0.0
        %1163 = vmatpush1.msra.mxu0 0.0
        %1164 = vmatprep.subr.mxu0 0.0
        %1165 = vmatpush1.msra.mxu0 0.0
        %1166 = vmatprep.subr.mxu0 0.0
        %v1167 = vand.u32 %v960, 4294901760
        %v1168 = vsub.f32 %v960, %v1167
        %1169 = vmatpush1.msra.mxu0 %v1168
        %1170 = vmatprep.subr.mxu0 0.0
        %v1171 = vand.u32 %v959, 4294901760
        %v1172 = vsub.f32 %v959, %v1171
        %1173 = vmatpush1.msra.mxu0 %v1172
        %1174 = vmatprep.subr.mxu0 0.0
        %v1175 = vand.u32 %v958, 4294901760
        %v1176 = vsub.f32 %v958, %v1175
        %1177 = vmatpush1.msra.mxu0 %v1176
        %1178 = vmatprep.subr.mxu0 0.0
        %v1179 = vand.u32 %v957, 4294901760
        %v1180 = vsub.f32 %v957, %v1179
        %1181 = vmatpush1.msra.mxu0 %v1180
        %1182 = vmatprep.subr.mxu0 0.0
        %1183 = vmatpush2.msra.mxu0 0.0
        %1184 = vmatprep.subr.mxu0 0.0
        %1185 = vmatpush2.msra.mxu0 0.0
        %1186 = vmatprep.subr.mxu0 0.0
        %1187 = vmatpush2.msra.mxu0 0.0
        %1188 = vmatprep.subr.mxu0 0.0
        %1189 = vmatpush2.msra.mxu0 0.0
        %1190 = vmatprep.subr.mxu0 0.0
        %1191 = vmatpush2.msra.mxu0 0.0
        %1192 = vmatprep.subr.mxu0 0.0
        %1193 = vmatpush2.msra.mxu0 0.0
        %1194 = vmatprep.subr.mxu0 0.0
        %1195 = vmatpush2.msra.mxu0 0.0
        %1196 = vmatprep.subr.mxu0 0.0
        %1197 = vmatpush2.msra.mxu0 0.0
        %1198 = vmatprep.subr.mxu0 0.0
        %1199 = vmatpush2.msra.mxu0 0.0
        %1200 = vmatprep.subr.mxu0 0.0
        %1201 = vmatpush2.msra.mxu0 0.0
        %1202 = vmatprep.subr.mxu0 0.0
        %1203 = vmatpush2.msra.mxu0 0.0
        %1204 = vmatprep.subr.mxu0 0.0
        %1205 = vmatpush2.msra.mxu0 0.0
        %1206 = vmatprep.subr.mxu0 0.0
        %1207 = vmatpush2.msra.mxu0 0.0
        %1208 = vmatprep.subr.mxu0 0.0
        %1209 = vmatpush2.msra.mxu0 0.0
        %1210 = vmatprep.subr.mxu0 0.0
        %1211 = vmatpush2.msra.mxu0 0.0
        %1212 = vmatprep.subr.mxu0 0.0
        %1213 = vmatpush2.msra.mxu0 0.0
        %1214 = vmatprep.mubr.f32.mxu0 0.0
        %v1215 = vand.u32 %v970, 4294901760
        %v1216 = vsub.f32 %v970, %v1215
        %1217 = vmatmul.mubr.f32.gmra.mxu0 %v1216
        %v1218 = vpop.f32.mrf.mxu0
        %v1219 = vadd.f32 %v1139, %v1218
        %v1220 = vpop.f32.mrf.mxu0
        %1221 = vdwg.mxu0
        %1222 = vmatprep.subr.mxu0 0.0
        %1223 = vmatpush1.msra.mxu0 0.0
        %1224 = vmatprep.subr.mxu0 0.0
        %1225 = vmatpush1.msra.mxu0 0.0
        %1226 = vmatprep.subr.mxu0 0.0
        %1227 = vmatpush1.msra.mxu0 0.0
        %1228 = vmatprep.subr.mxu0 0.0
        %1229 = vmatpush1.msra.mxu0 0.0
        %1230 = vmatprep.subr.mxu0 0.0
        %1231 = vmatpush1.msra.mxu0 0.0
        %1232 = vmatprep.subr.mxu0 0.0
        %1233 = vmatpush1.msra.mxu0 0.0
        %1234 = vmatprep.subr.mxu0 0.0
        %1235 = vmatpush1.msra.mxu0 0.0
        %1236 = vmatprep.subr.mxu0 0.0
        %1237 = vmatpush1.msra.mxu0 0.0
        %1238 = vmatprep.subr.mxu0 0.0
        %1239 = vmatpush1.msra.mxu0 0.0
        %1240 = vmatprep.subr.mxu0 0.0
        %1241 = vmatpush1.msra.mxu0 0.0
        %1242 = vmatprep.subr.mxu0 0.0
        %1243 = vmatpush1.msra.mxu0 0.0
        %1244 = vmatprep.subr.mxu0 0.0
        %1245 = vmatpush1.msra.mxu0 0.0
        %1246 = vmatprep.subr.mxu0 0.0
        %v1247 = vand.u32 %v960, 4294901760
        %1248 = vmatpush1.msra.mxu0 %v1247
        %1249 = vmatprep.subr.mxu0 0.0
        %v1250 = vand.u32 %v959, 4294901760
        %1251 = vmatpush1.msra.mxu0 %v1250
        %1252 = vmatprep.subr.mxu0 0.0
        %v1253 = vand.u32 %v958, 4294901760
        %1254 = vmatpush1.msra.mxu0 %v1253
        %1255 = vmatprep.subr.mxu0 0.0
        %v1256 = vand.u32 %v957, 4294901760
        %1257 = vmatpush1.msra.mxu0 %v1256
        %1258 = vmatprep.subr.mxu0 0.0
        %1259 = vmatpush2.msra.mxu0 0.0
        %1260 = vmatprep.subr.mxu0 0.0
        %1261 = vmatpush2.msra.mxu0 0.0
        %1262 = vmatprep.subr.mxu0 0.0
        %1263 = vmatpush2.msra.mxu0 0.0
        %1264 = vmatprep.subr.mxu0 0.0
        %1265 = vmatpush2.msra.mxu0 0.0
        %1266 = vmatprep.subr.mxu0 0.0
        %1267 = vmatpush2.msra.mxu0 0.0
        %1268 = vmatprep.subr.mxu0 0.0
        %1269 = vmatpush2.msra.mxu0 0.0
        %1270 = vmatprep.subr.mxu0 0.0
        %1271 = vmatpush2.msra.mxu0 0.0
        %1272 = vmatprep.subr.mxu0 0.0
        %1273 = vmatpush2.msra.mxu0 0.0
        %1274 = vmatprep.subr.mxu0 0.0
        %1275 = vmatpush2.msra.mxu0 0.0
        %1276 = vmatprep.subr.mxu0 0.0
        %1277 = vmatpush2.msra.mxu0 0.0
        %1278 = vmatprep.subr.mxu0 0.0
        %1279 = vmatpush2.msra.mxu0 0.0
        %1280 = vmatprep.subr.mxu0 0.0
        %1281 = vmatpush2.msra.mxu0 0.0
        %1282 = vmatprep.subr.mxu0 0.0
        %1283 = vmatpush2.msra.mxu0 0.0
        %1284 = vmatprep.subr.mxu0 0.0
        %1285 = vmatpush2.msra.mxu0 0.0
        %1286 = vmatprep.subr.mxu0 0.0
        %1287 = vmatpush2.msra.mxu0 0.0
        %1288 = vmatprep.subr.mxu0 0.0
        %1289 = vmatpush2.msra.mxu0 0.0
        %1290 = vmatprep.mubr.f32.mxu0 0.0
        %v1291 = vand.u32 %v970, 4294901760
        %v1292 = vsub.f32 %v970, %v1291
        %v1293 = vand.u32 %v1292, 4294901760
        %1294 = vmatmul.mubr.f32.gmra.mxu0 %v1293
        %v1295 = vpop.f32.mrf.mxu0
        %v1296 = vadd.f32 %v1219, %v1295
        %v1297 = vpop.f32.mrf.mxu0
        %1298 = vdwg.mxu0
        %1299 = vmatprep.subr.mxu0 0.0
        %1300 = vmatpush1.msra.mxu0 0.0
        %1301 = vmatprep.subr.mxu0 0.0
        %1302 = vmatpush1.msra.mxu0 0.0
        %1303 = vmatprep.subr.mxu0 0.0
        %1304 = vmatpush1.msra.mxu0 0.0
        %1305 = vmatprep.subr.mxu0 0.0
        %1306 = vmatpush1.msra.mxu0 0.0
        %1307 = vmatprep.subr.mxu0 0.0
        %1308 = vmatpush1.msra.mxu0 0.0
        %1309 = vmatprep.subr.mxu0 0.0
        %1310 = vmatpush1.msra.mxu0 0.0
        %1311 = vmatprep.subr.mxu0 0.0
        %1312 = vmatpush1.msra.mxu0 0.0
        %1313 = vmatprep.subr.mxu0 0.0
        %1314 = vmatpush1.msra.mxu0 0.0
        %1315 = vmatprep.subr.mxu0 0.0
        %1316 = vmatpush1.msra.mxu0 0.0
        %1317 = vmatprep.subr.mxu0 0.0
        %1318 = vmatpush1.msra.mxu0 0.0
        %1319 = vmatprep.subr.mxu0 0.0
        %1320 = vmatpush1.msra.mxu0 0.0
        %1321 = vmatprep.subr.mxu0 0.0
        %1322 = vmatpush1.msra.mxu0 0.0
        %1323 = vmatprep.subr.mxu0 0.0
        %v1324 = vand.u32 %v960, 4294901760
        %v1325 = vsub.f32 %v960, %v1324
        %v1326 = vand.u32 %v1325, 4294901760
        %1327 = vmatpush1.msra.mxu0 %v1326
        %1328 = vmatprep.subr.mxu0 0.0
        %v1329 = vand.u32 %v959, 4294901760
        %v1330 = vsub.f32 %v959, %v1329
        %v1331 = vand.u32 %v1330, 4294901760
        %1332 = vmatpush1.msra.mxu0 %v1331
        %1333 = vmatprep.subr.mxu0 0.0
        %v1334 = vand.u32 %v958, 4294901760
        %v1335 = vsub.f32 %v958, %v1334
        %v1336 = vand.u32 %v1335, 4294901760
        %1337 = vmatpush1.msra.mxu0 %v1336
        %1338 = vmatprep.subr.mxu0 0.0
        %v1339 = vand.u32 %v957, 4294901760
        %v1340 = vsub.f32 %v957, %v1339
        %v1341 = vand.u32 %v1340, 4294901760
        %1342 = vmatpush1.msra.mxu0 %v1341
        %1343 = vmatprep.subr.mxu0 0.0
        %1344 = vmatpush2.msra.mxu0 0.0
        %1345 = vmatprep.subr.mxu0 0.0
        %1346 = vmatpush2.msra.mxu0 0.0
        %1347 = vmatprep.subr.mxu0 0.0
        %1348 = vmatpush2.msra.mxu0 0.0
        %1349 = vmatprep.subr.mxu0 0.0
        %1350 = vmatpush2.msra.mxu0 0.0
        %1351 = vmatprep.subr.mxu0 0.0
        %1352 = vmatpush2.msra.mxu0 0.0
        %1353 = vmatprep.subr.mxu0 0.0
        %1354 = vmatpush2.msra.mxu0 0.0
        %1355 = vmatprep.subr.mxu0 0.0
        %1356 = vmatpush2.msra.mxu0 0.0
        %1357 = vmatprep.subr.mxu0 0.0
        %1358 = vmatpush2.msra.mxu0 0.0
        %1359 = vmatprep.subr.mxu0 0.0
        %1360 = vmatpush2.msra.mxu0 0.0
        %1361 = vmatprep.subr.mxu0 0.0
        %1362 = vmatpush2.msra.mxu0 0.0
        %1363 = vmatprep.subr.mxu0 0.0
        %1364 = vmatpush2.msra.mxu0 0.0
        %1365 = vmatprep.subr.mxu0 0.0
        %1366 = vmatpush2.msra.mxu0 0.0
        %1367 = vmatprep.subr.mxu0 0.0
        %1368 = vmatpush2.msra.mxu0 0.0
        %1369 = vmatprep.subr.mxu0 0.0
        %1370 = vmatpush2.msra.mxu0 0.0
        %1371 = vmatprep.subr.mxu0 0.0
        %1372 = vmatpush2.msra.mxu0 0.0
        %1373 = vmatprep.subr.mxu0 0.0
        %1374 = vmatpush2.msra.mxu0 0.0
        %1375 = vmatprep.mubr.f32.mxu0 0.0
        %v1376 = vand.u32 %v970, 4294901760
        %1377 = vmatmul.mubr.f32.gmra.mxu0 %v1376
        %v1378 = vpop.f32.mrf.mxu0
        %v1379 = vadd.f32 %v1296, %v1378
        %v1380 = vpop.f32.mrf.mxu0
        %1381 = vdwg.mxu0
        %1382 = vmatprep.subr.mxu0 0.0
        %1383 = vmatpush1.msra.mxu0 0.0
        %1384 = vmatprep.subr.mxu0 0.0
        %1385 = vmatpush1.msra.mxu0 0.0
        %1386 = vmatprep.subr.mxu0 0.0
        %1387 = vmatpush1.msra.mxu0 0.0
        %1388 = vmatprep.subr.mxu0 0.0
        %1389 = vmatpush1.msra.mxu0 0.0
        %1390 = vmatprep.subr.mxu0 0.0
        %1391 = vmatpush1.msra.mxu0 0.0
        %1392 = vmatprep.subr.mxu0 0.0
        %1393 = vmatpush1.msra.mxu0 0.0
        %1394 = vmatprep.subr.mxu0 0.0
        %1395 = vmatpush1.msra.mxu0 0.0
        %1396 = vmatprep.subr.mxu0 0.0
        %1397 = vmatpush1.msra.mxu0 0.0
        %1398 = vmatprep.subr.mxu0 0.0
        %1399 = vmatpush1.msra.mxu0 0.0
        %1400 = vmatprep.subr.mxu0 0.0
        %1401 = vmatpush1.msra.mxu0 0.0
        %1402 = vmatprep.subr.mxu0 0.0
        %1403 = vmatpush1.msra.mxu0 0.0
        %1404 = vmatprep.subr.mxu0 0.0
        %1405 = vmatpush1.msra.mxu0 0.0
        %1406 = vmatprep.subr.mxu0 0.0
        %v1407 = vand.u32 %v960, 4294901760
        %1408 = vmatpush1.msra.mxu0 %v1407
        %1409 = vmatprep.subr.mxu0 0.0
        %v1410 = vand.u32 %v959, 4294901760
        %1411 = vmatpush1.msra.mxu0 %v1410
        %1412 = vmatprep.subr.mxu0 0.0
        %v1413 = vand.u32 %v958, 4294901760
        %1414 = vmatpush1.msra.mxu0 %v1413
        %1415 = vmatprep.subr.mxu0 0.0
        %v1416 = vand.u32 %v957, 4294901760
        %1417 = vmatpush1.msra.mxu0 %v1416
        %1418 = vmatprep.subr.mxu0 0.0
        %1419 = vmatpush2.msra.mxu0 0.0
        %1420 = vmatprep.subr.mxu0 0.0
        %1421 = vmatpush2.msra.mxu0 0.0
        %1422 = vmatprep.subr.mxu0 0.0
        %1423 = vmatpush2.msra.mxu0 0.0
        %1424 = vmatprep.subr.mxu0 0.0
        %1425 = vmatpush2.msra.mxu0 0.0
        %1426 = vmatprep.subr.mxu0 0.0
        %1427 = vmatpush2.msra.mxu0 0.0
        %1428 = vmatprep.subr.mxu0 0.0
        %1429 = vmatpush2.msra.mxu0 0.0
        %1430 = vmatprep.subr.mxu0 0.0
        %1431 = vmatpush2.msra.mxu0 0.0
        %1432 = vmatprep.subr.mxu0 0.0
        %1433 = vmatpush2.msra.mxu0 0.0
        %1434 = vmatprep.subr.mxu0 0.0
        %1435 = vmatpush2.msra.mxu0 0.0
        %1436 = vmatprep.subr.mxu0 0.0
        %1437 = vmatpush2.msra.mxu0 0.0
        %1438 = vmatprep.subr.mxu0 0.0
        %1439 = vmatpush2.msra.mxu0 0.0
        %1440 = vmatprep.subr.mxu0 0.0
        %1441 = vmatpush2.msra.mxu0 0.0
        %1442 = vmatprep.subr.mxu0 0.0
        %1443 = vmatpush2.msra.mxu0 0.0
        %1444 = vmatprep.subr.mxu0 0.0
        %1445 = vmatpush2.msra.mxu0 0.0
        %1446 = vmatprep.subr.mxu0 0.0
        %1447 = vmatpush2.msra.mxu0 0.0
        %1448 = vmatprep.subr.mxu0 0.0
        %1449 = vmatpush2.msra.mxu0 0.0
        %1450 = vmatprep.mubr.f32.mxu0 0.0
        %v1451 = vand.u32 %v970, 4294901760
        %1452 = vmatmul.mubr.f32.gmra.mxu0 %v1451
        %v1453 = vpop.f32.mrf.mxu0
        %v1454 = vadd.f32 %v1379, %v1453
        %v1455 = vpop.f32.mrf.mxu0
        %1456 = vdwg.mxu0
        %v1457 = vmax.f32 %v1454, 0.0
        %v1459 = vcombine.high %v1457, %v1457
        %v1461 = vunpack.c.l.s4 1966171168
        %v1462 = vunpack.c.0.s8 %v1461
        %v1463 = vlaneseq
        %v1464 = vshrl.u32 %v1463, 7
        %v1465 = vsub.s32 %v1462, %v1464
        %v1466 = vrot.slane %v1457, %v1465
        %v1468 = vunpack.c.l.s4 1966171168
        %v1469 = vunpack.c.0.s8 %v1468
        %v1470 = vlaneseq
        %v1471 = vshrl.u32 %v1470, 7
        %v1472 = vsub.s32 %v1469, %v1471
        %v1473 = vrot.slane %v1459, %v1472
        %v1474 = vcombine.high %v1466, %v1466
        %v1475 = vcombine.high %v1473, %v1473
        %v1477 = vunpack.c.l.s4 1966171168
        %v1478 = vunpack.c.0.s8 %v1477
        %v1479 = vlaneseq
        %v1480 = vshrl.u32 %v1479, 7
        %v1481 = vsub.s32 %v1478, %v1480
        %v1482 = vrot.slane %v1466, %v1481
        %v1484 = vunpack.c.l.s4 1966171168
        %v1485 = vunpack.c.0.s8 %v1484
        %v1486 = vlaneseq
        %v1487 = vshrl.u32 %v1486, 7
        %v1488 = vsub.s32 %v1485, %v1487
        %v1489 = vrot.slane %v1473, %v1488
        %v1491 = vunpack.c.l.s4 1966171168
        %v1492 = vunpack.c.0.s8 %v1491
        %v1493 = vlaneseq
        %v1494 = vshrl.u32 %v1493, 7
        %v1495 = vsub.s32 %v1492, %v1494
        %v1496 = vrot.slane %v1474, %v1495
        %v1498 = vunpack.c.l.s4 1966171168
        %v1499 = vunpack.c.0.s8 %v1498
        %v1500 = vlaneseq
        %v1501 = vshrl.u32 %v1500, 7
        %v1502 = vsub.s32 %v1499, %v1501
        %v1503 = vrot.slane %v1475, %v1502
        %v1504 = vcombine.high %v1482, %v1482
        %v1505 = vcombine.high %v1489, %v1489
        %v1506 = vcombine.high %v1496, %v1496
        %v1507 = vcombine.high %v1503, %v1503
        %v1508 = vlaneseq
        %v1509 = vshrl.u32 %v1508, 7
        %v1510 = vsub.s32 0, %v1509
        %v1511 = vrot.slane %v1482, %v1510
        %v1512 = vlaneseq
        %v1513 = vshrl.u32 %v1512, 7
        %v1514 = vsub.s32 0, %v1513
        %v1515 = vrot.slane %v1496, %v1514
        %v1516 = vlaneseq
        %v1517 = vshrl.u32 %v1516, 7
        %v1518 = vsub.s32 0, %v1517
        %v1519 = vrot.slane %v1504, %v1518
        %v1520 = vlaneseq
        %v1521 = vshrl.u32 %v1520, 7
        %v1522 = vsub.s32 0, %v1521
        %v1523 = vrot.slane %v1506, %v1522
        %v1524 = vlaneseq
        %v1525 = vshrl.u32 %v1524, 7
        %v1526 = vsub.s32 0, %v1525
        %v1527 = vrot.slane %v1489, %v1526
        %v1528 = vlaneseq
        %v1529 = vshrl.u32 %v1528, 7
        %v1530 = vsub.s32 0, %v1529
        %v1531 = vrot.slane %v1503, %v1530
        %v1532 = vlaneseq
        %v1533 = vshrl.u32 %v1532, 7
        %v1534 = vsub.s32 0, %v1533
        %v1535 = vrot.slane %v1505, %v1534
        %v1536 = vlaneseq
        %v1537 = vshrl.u32 %v1536, 7
        %v1538 = vsub.s32 0, %v1537
        %v1539 = vrot.slane %v1507, %v1538
        %v1548 = vmul.f32 %v1511, %v953
        %v1549 = vmul.f32 %v1515, %v953
        %v1550 = vmul.f32 %v1519, %v953
        %v1551 = vmul.f32 %v1523, %v953
        %v1552 = vmul.f32 %v1527, %v953
        %v1553 = vmul.f32 %v1531, %v953
        %v1554 = vmul.f32 %v1535, %v953
        %v1555 = vmul.f32 %v1539, %v953
        %v1556 = vld [vmem:[%s6] sm:$0xff]
        %v1557 = vld [vmem:[%s6 + $0x8] sm:$0xff]
        %v1558 = vld [vmem:[%s6 + $0x10] sm:$0xff]
        %v1559 = vld [vmem:[%s6 + $0x18] sm:$0xff]
        %v1560 = vld [vmem:[%s6 + $0x20] sm:$0xff]
        %v1561 = vld [vmem:[%s6 + $0x28] sm:$0xff]
        %v1562 = vld [vmem:[%s6 + $0x30] sm:$0xff]
        %v1563 = vld [vmem:[%s6 + $0x38] sm:$0xff]
        %v1564 = vld [vmem:[%s6 + $0x40] sm:$0xff]
        %v1565 = vld [vmem:[%s6 + $0x48] sm:$0xff]
        %v1566 = vld [vmem:[%s6 + $0x50] sm:$0xff]
        %v1567 = vld [vmem:[%s6 + $0x58] sm:$0xff]
        %v1568 = vld [vmem:[%s6 + $0x60] sm:$0xff]
        %v1569 = vld [vmem:[%s6 + $0x68] sm:$0xff]
        %v1570 = vld [vmem:[%s6 + $0x70] sm:$0xff]
        %v1571 = vld [vmem:[%s6 + $0x78] sm:$0xff]
        %v1572 = vld [vmem:[%s7] sm:$0x1]
        %v1574 = vlaneseq
        %v1575 = vshrl.u32 %v1574, 7
        %v1576 = vsub.s32 0, %v1575
        %v1577 = vrot.slane %v1572, %v1576
        %1579 = vmatprep.subr.mxu0 0.0
        %v1580 = vand.u32 %v1571, 4294901760
        %1581 = vmatpush1.msra.mxu0 %v1580
        %1582 = vmatprep.subr.mxu0 0.0
        %v1583 = vand.u32 %v1570, 4294901760
        %1584 = vmatpush1.msra.mxu0 %v1583
        %1585 = vmatprep.subr.mxu0 0.0
        %v1586 = vand.u32 %v1569, 4294901760
        %1587 = vmatpush1.msra.mxu0 %v1586
        %1588 = vmatprep.subr.mxu0 0.0
        %v1589 = vand.u32 %v1568, 4294901760
        %1590 = vmatpush1.msra.mxu0 %v1589
        %1591 = vmatprep.subr.mxu0 0.0
        %v1592 = vand.u32 %v1567, 4294901760
        %1593 = vmatpush1.msra.mxu0 %v1592
        %1594 = vmatprep.subr.mxu0 0.0
        %v1595 = vand.u32 %v1566, 4294901760
        %1596 = vmatpush1.msra.mxu0 %v1595
        %1597 = vmatprep.subr.mxu0 0.0
        %v1598 = vand.u32 %v1565, 4294901760
        %1599 = vmatpush1.msra.mxu0 %v1598
        %1600 = vmatprep.subr.mxu0 0.0
        %v1601 = vand.u32 %v1564, 4294901760
        %1602 = vmatpush1.msra.mxu0 %v1601
        %1603 = vmatprep.subr.mxu0 0.0
        %v1604 = vand.u32 %v1563, 4294901760
        %1605 = vmatpush1.msra.mxu0 %v1604
        %1606 = vmatprep.subr.mxu0 0.0
        %v1607 = vand.u32 %v1562, 4294901760
        %1608 = vmatpush1.msra.mxu0 %v1607
        %1609 = vmatprep.subr.mxu0 0.0
        %v1610 = vand.u32 %v1561, 4294901760
        %1611 = vmatpush1.msra.mxu0 %v1610
        %1612 = vmatprep.subr.mxu0 0.0
        %v1613 = vand.u32 %v1560, 4294901760
        %1614 = vmatpush1.msra.mxu0 %v1613
        %1615 = vmatprep.subr.mxu0 0.0
        %v1616 = vand.u32 %v1559, 4294901760
        %1617 = vmatpush1.msra.mxu0 %v1616
        %1618 = vmatprep.subr.mxu0 0.0
        %v1619 = vand.u32 %v1558, 4294901760
        %1620 = vmatpush1.msra.mxu0 %v1619
        %1621 = vmatprep.subr.mxu0 0.0
        %v1622 = vand.u32 %v1557, 4294901760
        %1623 = vmatpush1.msra.mxu0 %v1622
        %1624 = vmatprep.subr.mxu0 0.0
        %v1625 = vand.u32 %v1556, 4294901760
        %1626 = vmatpush1.msra.mxu0 %v1625
        %1627 = vmatprep.subr.mxu0 0.0
        %1628 = vmatpush2.msra.mxu0 0.0
        %1629 = vmatprep.subr.mxu0 0.0
        %1630 = vmatpush2.msra.mxu0 0.0
        %1631 = vmatprep.subr.mxu0 0.0
        %1632 = vmatpush2.msra.mxu0 0.0
        %1633 = vmatprep.subr.mxu0 0.0
        %1634 = vmatpush2.msra.mxu0 0.0
        %1635 = vmatprep.subr.mxu0 0.0
        %1636 = vmatpush2.msra.mxu0 0.0
        %1637 = vmatprep.subr.mxu0 0.0
        %1638 = vmatpush2.msra.mxu0 0.0
        %1639 = vmatprep.subr.mxu0 0.0
        %1640 = vmatpush2.msra.mxu0 0.0
        %1641 = vmatprep.subr.mxu0 0.0
        %1642 = vmatpush2.msra.mxu0 0.0
        %1643 = vmatprep.subr.mxu0 0.0
        %1644 = vmatpush2.msra.mxu0 0.0
        %1645 = vmatprep.subr.mxu0 0.0
        %1646 = vmatpush2.msra.mxu0 0.0
        %1647 = vmatprep.subr.mxu0 0.0
        %1648 = vmatpush2.msra.mxu0 0.0
        %1649 = vmatprep.subr.mxu0 0.0
        %1650 = vmatpush2.msra.mxu0 0.0
        %1651 = vmatprep.subr.mxu0 0.0
        %1652 = vmatpush2.msra.mxu0 0.0
        %1653 = vmatprep.subr.mxu0 0.0
        %1654 = vmatpush2.msra.mxu0 0.0
        %1655 = vmatprep.subr.mxu0 0.0
        %1656 = vmatpush2.msra.mxu0 0.0
        %1657 = vmatprep.subr.mxu0 0.0
        %1658 = vmatpush2.msra.mxu0 0.0
        %1659 = vmatprep.mubr.f32.mxu0 0.0
        %v1660 = vand.u32 %v1548, 4294901760
        %v1661 = vsub.f32 %v1548, %v1660
        %v1662 = vand.u32 %v1661, 4294901760
        %v1663 = vsub.f32 %v1661, %v1662
        %v1664 = vand.u32 %v1663, 4294901760
        %1665 = vmatmul.mubr.f32.gmra.mxu0 %v1664
        %v1666 = vpop.f32.mrf.mxu0
        %v1667 = vadd.f32 %v1577, %v1666
        %v1668 = vpop.f32.mrf.mxu0
        %1669 = vmatprep.mubr.f32.mxu0 0.0
        %v1670 = vand.u32 %v1549, 4294901760
        %v1671 = vsub.f32 %v1549, %v1670
        %v1672 = vand.u32 %v1671, 4294901760
        %v1673 = vsub.f32 %v1671, %v1672
        %v1674 = vand.u32 %v1673, 4294901760
        %1675 = vmatmul.mubr.f32.gmra.mxu0 %v1674
        %v1676 = vpop.f32.mrf.mxu0
        %v1677 = vadd.f32 %v1577, %v1676
        %v1678 = vpop.f32.mrf.mxu0
        %1679 = vmatprep.mubr.f32.mxu0 0.0
        %v1680 = vand.u32 %v1550, 4294901760
        %v1681 = vsub.f32 %v1550, %v1680
        %v1682 = vand.u32 %v1681, 4294901760
        %v1683 = vsub.f32 %v1681, %v1682
        %v1684 = vand.u32 %v1683, 4294901760
        %1685 = vmatmul.mubr.f32.gmra.mxu0 %v1684
        %v1686 = vpop.f32.mrf.mxu0
        %v1687 = vadd.f32 %v1577, %v1686
        %v1688 = vpop.f32.mrf.mxu0
        %1689 = vmatprep.mubr.f32.mxu0 0.0
        %v1690 = vand.u32 %v1551, 4294901760
        %v1691 = vsub.f32 %v1551, %v1690
        %v1692 = vand.u32 %v1691, 4294901760
        %v1693 = vsub.f32 %v1691, %v1692
        %v1694 = vand.u32 %v1693, 4294901760
        %1695 = vmatmul.mubr.f32.gmra.mxu0 %v1694
        %v1696 = vpop.f32.mrf.mxu0
        %v1697 = vadd.f32 %v1577, %v1696
        %v1698 = vpop.f32.mrf.mxu0
        %1699 = vmatprep.mubr.f32.mxu0 0.0
        %v1700 = vand.u32 %v1552, 4294901760
        %v1701 = vsub.f32 %v1552, %v1700
        %v1702 = vand.u32 %v1701, 4294901760
        %v1703 = vsub.f32 %v1701, %v1702
        %v1704 = vand.u32 %v1703, 4294901760
        %1705 = vmatmul.mubr.f32.gmra.mxu0 %v1704
        %v1706 = vpop.f32.mrf.mxu0
        %v1707 = vadd.f32 %v1577, %v1706
        %v1708 = vpop.f32.mrf.mxu0
        %1709 = vmatprep.mubr.f32.mxu0 0.0
        %v1710 = vand.u32 %v1553, 4294901760
        %v1711 = vsub.f32 %v1553, %v1710
        %v1712 = vand.u32 %v1711, 4294901760
        %v1713 = vsub.f32 %v1711, %v1712
        %v1714 = vand.u32 %v1713, 4294901760
        %1715 = vmatmul.mubr.f32.gmra.mxu0 %v1714
        %v1716 = vpop.f32.mrf.mxu0
        %v1717 = vadd.f32 %v1577, %v1716
        %v1718 = vpop.f32.mrf.mxu0
        %1719 = vmatprep.mubr.f32.mxu0 0.0
        %v1720 = vand.u32 %v1554, 4294901760
        %v1721 = vsub.f32 %v1554, %v1720
        %v1722 = vand.u32 %v1721, 4294901760
        %v1723 = vsub.f32 %v1721, %v1722
        %v1724 = vand.u32 %v1723, 4294901760
        %1725 = vmatmul.mubr.f32.gmra.mxu0 %v1724
        %v1726 = vpop.f32.mrf.mxu0
        %v1727 = vadd.f32 %v1577, %v1726
        %v1728 = vpop.f32.mrf.mxu0
        %1729 = vmatprep.mubr.f32.mxu0 0.0
        %v1730 = vand.u32 %v1555, 4294901760
        %v1731 = vsub.f32 %v1555, %v1730
        %v1732 = vand.u32 %v1731, 4294901760
        %v1733 = vsub.f32 %v1731, %v1732
        %v1734 = vand.u32 %v1733, 4294901760
        %1735 = vmatmul.mubr.f32.gmra.mxu0 %v1734
        %v1736 = vpop.f32.mrf.mxu0
        %v1737 = vadd.f32 %v1577, %v1736
        %v1738 = vpop.f32.mrf.mxu0
        %1739 = vdwg.mxu0
        %1740 = vmatprep.subr.mxu0 0.0
        %v1741 = vand.u32 %v1571, 4294901760
        %v1742 = vsub.f32 %v1571, %v1741
        %v1743 = vand.u32 %v1742, 4294901760
        %v1744 = vsub.f32 %v1742, %v1743
        %v1745 = vand.u32 %v1744, 4294901760
        %1746 = vmatpush1.msra.mxu0 %v1745
        %1747 = vmatprep.subr.mxu0 0.0
        %v1748 = vand.u32 %v1570, 4294901760
        %v1749 = vsub.f32 %v1570, %v1748
        %v1750 = vand.u32 %v1749, 4294901760
        %v1751 = vsub.f32 %v1749, %v1750
        %v1752 = vand.u32 %v1751, 4294901760
        %1753 = vmatpush1.msra.mxu0 %v1752
        %1754 = vmatprep.subr.mxu0 0.0
        %v1755 = vand.u32 %v1569, 4294901760
        %v1756 = vsub.f32 %v1569, %v1755
        %v1757 = vand.u32 %v1756, 4294901760
        %v1758 = vsub.f32 %v1756, %v1757
        %v1759 = vand.u32 %v1758, 4294901760
        %1760 = vmatpush1.msra.mxu0 %v1759
        %1761 = vmatprep.subr.mxu0 0.0
        %v1762 = vand.u32 %v1568, 4294901760
        %v1763 = vsub.f32 %v1568, %v1762
        %v1764 = vand.u32 %v1763, 4294901760
        %v1765 = vsub.f32 %v1763, %v1764
        %v1766 = vand.u32 %v1765, 4294901760
        %1767 = vmatpush1.msra.mxu0 %v1766
        %1768 = vmatprep.subr.mxu0 0.0
        %v1769 = vand.u32 %v1567, 4294901760
        %v1770 = vsub.f32 %v1567, %v1769
        %v1771 = vand.u32 %v1770, 4294901760
        %v1772 = vsub.f32 %v1770, %v1771
        %v1773 = vand.u32 %v1772, 4294901760
        %1774 = vmatpush1.msra.mxu0 %v1773
        %1775 = vmatprep.subr.mxu0 0.0
        %v1776 = vand.u32 %v1566, 4294901760
        %v1777 = vsub.f32 %v1566, %v1776
        %v1778 = vand.u32 %v1777, 4294901760
        %v1779 = vsub.f32 %v1777, %v1778
        %v1780 = vand.u32 %v1779, 4294901760
        %1781 = vmatpush1.msra.mxu0 %v1780
        %1782 = vmatprep.subr.mxu0 0.0
        %v1783 = vand.u32 %v1565, 4294901760
        %v1784 = vsub.f32 %v1565, %v1783
        %v1785 = vand.u32 %v1784, 4294901760
        %v1786 = vsub.f32 %v1784, %v1785
        %v1787 = vand.u32 %v1786, 4294901760
        %1788 = vmatpush1.msra.mxu0 %v1787
        %1789 = vmatprep.subr.mxu0 0.0
        %v1790 = vand.u32 %v1564, 4294901760
        %v1791 = vsub.f32 %v1564, %v1790
        %v1792 = vand.u32 %v1791, 4294901760
        %v1793 = vsub.f32 %v1791, %v1792
        %v1794 = vand.u32 %v1793, 4294901760
        %1795 = vmatpush1.msra.mxu0 %v1794
        %1796 = vmatprep.subr.mxu0 0.0
        %v1797 = vand.u32 %v1563, 4294901760
        %v1798 = vsub.f32 %v1563, %v1797
        %v1799 = vand.u32 %v1798, 4294901760
        %v1800 = vsub.f32 %v1798, %v1799
        %v1801 = vand.u32 %v1800, 4294901760
        %1802 = vmatpush1.msra.mxu0 %v1801
        %1803 = vmatprep.subr.mxu0 0.0
        %v1804 = vand.u32 %v1562, 4294901760
        %v1805 = vsub.f32 %v1562, %v1804
        %v1806 = vand.u32 %v1805, 4294901760
        %v1807 = vsub.f32 %v1805, %v1806
        %v1808 = vand.u32 %v1807, 4294901760
        %1809 = vmatpush1.msra.mxu0 %v1808
        %1810 = vmatprep.subr.mxu0 0.0
        %v1811 = vand.u32 %v1561, 4294901760
        %v1812 = vsub.f32 %v1561, %v1811
        %v1813 = vand.u32 %v1812, 4294901760
        %v1814 = vsub.f32 %v1812, %v1813
        %v1815 = vand.u32 %v1814, 4294901760
        %1816 = vmatpush1.msra.mxu0 %v1815
        %1817 = vmatprep.subr.mxu0 0.0
        %v1818 = vand.u32 %v1560, 4294901760
        %v1819 = vsub.f32 %v1560, %v1818
        %v1820 = vand.u32 %v1819, 4294901760
        %v1821 = vsub.f32 %v1819, %v1820
        %v1822 = vand.u32 %v1821, 4294901760
        %1823 = vmatpush1.msra.mxu0 %v1822
        %1824 = vmatprep.subr.mxu0 0.0
        %v1825 = vand.u32 %v1559, 4294901760
        %v1826 = vsub.f32 %v1559, %v1825
        %v1827 = vand.u32 %v1826, 4294901760
        %v1828 = vsub.f32 %v1826, %v1827
        %v1829 = vand.u32 %v1828, 4294901760
        %1830 = vmatpush1.msra.mxu0 %v1829
        %1831 = vmatprep.subr.mxu0 0.0
        %v1832 = vand.u32 %v1558, 4294901760
        %v1833 = vsub.f32 %v1558, %v1832
        %v1834 = vand.u32 %v1833, 4294901760
        %v1835 = vsub.f32 %v1833, %v1834
        %v1836 = vand.u32 %v1835, 4294901760
        %1837 = vmatpush1.msra.mxu0 %v1836
        %1838 = vmatprep.subr.mxu0 0.0
        %v1839 = vand.u32 %v1557, 4294901760
        %v1840 = vsub.f32 %v1557, %v1839
        %v1841 = vand.u32 %v1840, 4294901760
        %v1842 = vsub.f32 %v1840, %v1841
        %v1843 = vand.u32 %v1842, 4294901760
        %1844 = vmatpush1.msra.mxu0 %v1843
        %1845 = vmatprep.subr.mxu0 0.0
        %v1846 = vand.u32 %v1556, 4294901760
        %v1847 = vsub.f32 %v1556, %v1846
        %v1848 = vand.u32 %v1847, 4294901760
        %v1849 = vsub.f32 %v1847, %v1848
        %v1850 = vand.u32 %v1849, 4294901760
        %1851 = vmatpush1.msra.mxu0 %v1850
        %1852 = vmatprep.subr.mxu0 0.0
        %1853 = vmatpush2.msra.mxu0 0.0
        %1854 = vmatprep.subr.mxu0 0.0
        %1855 = vmatpush2.msra.mxu0 0.0
        %1856 = vmatprep.subr.mxu0 0.0
        %1857 = vmatpush2.msra.mxu0 0.0
        %1858 = vmatprep.subr.mxu0 0.0
        %1859 = vmatpush2.msra.mxu0 0.0
        %1860 = vmatprep.subr.mxu0 0.0
        %1861 = vmatpush2.msra.mxu0 0.0
        %1862 = vmatprep.subr.mxu0 0.0
        %1863 = vmatpush2.msra.mxu0 0.0
        %1864 = vmatprep.subr.mxu0 0.0
        %1865 = vmatpush2.msra.mxu0 0.0
        %1866 = vmatprep.subr.mxu0 0.0
        %1867 = vmatpush2.msra.mxu0 0.0
        %1868 = vmatprep.subr.mxu0 0.0
        %1869 = vmatpush2.msra.mxu0 0.0
        %1870 = vmatprep.subr.mxu0 0.0
        %1871 = vmatpush2.msra.mxu0 0.0
        %1872 = vmatprep.subr.mxu0 0.0
        %1873 = vmatpush2.msra.mxu0 0.0
        %1874 = vmatprep.subr.mxu0 0.0
        %1875 = vmatpush2.msra.mxu0 0.0
        %1876 = vmatprep.subr.mxu0 0.0
        %1877 = vmatpush2.msra.mxu0 0.0
        %1878 = vmatprep.subr.mxu0 0.0
        %1879 = vmatpush2.msra.mxu0 0.0
        %1880 = vmatprep.subr.mxu0 0.0
        %1881 = vmatpush2.msra.mxu0 0.0
        %1882 = vmatprep.subr.mxu0 0.0
        %1883 = vmatpush2.msra.mxu0 0.0
        %1884 = vmatprep.mubr.f32.mxu0 0.0
        %v1885 = vand.u32 %v1548, 4294901760
        %1886 = vmatmul.mubr.f32.gmra.mxu0 %v1885
        %v1887 = vpop.f32.mrf.mxu0
        %v1888 = vadd.f32 %v1667, %v1887
        %v1889 = vpop.f32.mrf.mxu0
        %1890 = vmatprep.mubr.f32.mxu0 0.0
        %v1891 = vand.u32 %v1549, 4294901760
        %1892 = vmatmul.mubr.f32.gmra.mxu0 %v1891
        %v1893 = vpop.f32.mrf.mxu0
        %v1894 = vadd.f32 %v1677, %v1893
        %v1895 = vpop.f32.mrf.mxu0
        %1896 = vmatprep.mubr.f32.mxu0 0.0
        %v1897 = vand.u32 %v1550, 4294901760
        %1898 = vmatmul.mubr.f32.gmra.mxu0 %v1897
        %v1899 = vpop.f32.mrf.mxu0
        %v1900 = vadd.f32 %v1687, %v1899
        %v1901 = vpop.f32.mrf.mxu0
        %1902 = vmatprep.mubr.f32.mxu0 0.0
        %v1903 = vand.u32 %v1551, 4294901760
        %1904 = vmatmul.mubr.f32.gmra.mxu0 %v1903
        %v1905 = vpop.f32.mrf.mxu0
        %v1906 = vadd.f32 %v1697, %v1905
        %v1907 = vpop.f32.mrf.mxu0
        %1908 = vmatprep.mubr.f32.mxu0 0.0
        %v1909 = vand.u32 %v1552, 4294901760
        %1910 = vmatmul.mubr.f32.gmra.mxu0 %v1909
        %v1911 = vpop.f32.mrf.mxu0
        %v1912 = vadd.f32 %v1707, %v1911
        %v1913 = vpop.f32.mrf.mxu0
        %1914 = vmatprep.mubr.f32.mxu0 0.0
        %v1915 = vand.u32 %v1553, 4294901760
        %1916 = vmatmul.mubr.f32.gmra.mxu0 %v1915
        %v1917 = vpop.f32.mrf.mxu0
        %v1918 = vadd.f32 %v1717, %v1917
        %v1919 = vpop.f32.mrf.mxu0
        %1920 = vmatprep.mubr.f32.mxu0 0.0
        %v1921 = vand.u32 %v1554, 4294901760
        %1922 = vmatmul.mubr.f32.gmra.mxu0 %v1921
        %v1923 = vpop.f32.mrf.mxu0
        %v1924 = vadd.f32 %v1727, %v1923
        %v1925 = vpop.f32.mrf.mxu0
        %1926 = vmatprep.mubr.f32.mxu0 0.0
        %v1927 = vand.u32 %v1555, 4294901760
        %1928 = vmatmul.mubr.f32.gmra.mxu0 %v1927
        %v1929 = vpop.f32.mrf.mxu0
        %v1930 = vadd.f32 %v1737, %v1929
        %v1931 = vpop.f32.mrf.mxu0
        %1932 = vdwg.mxu0
        %1933 = vmatprep.subr.mxu0 0.0
        %v1934 = vand.u32 %v1571, 4294901760
        %v1935 = vsub.f32 %v1571, %v1934
        %1936 = vmatpush1.msra.mxu0 %v1935
        %1937 = vmatprep.subr.mxu0 0.0
        %v1938 = vand.u32 %v1570, 4294901760
        %v1939 = vsub.f32 %v1570, %v1938
        %1940 = vmatpush1.msra.mxu0 %v1939
        %1941 = vmatprep.subr.mxu0 0.0
        %v1942 = vand.u32 %v1569, 4294901760
        %v1943 = vsub.f32 %v1569, %v1942
        %1944 = vmatpush1.msra.mxu0 %v1943
        %1945 = vmatprep.subr.mxu0 0.0
        %v1946 = vand.u32 %v1568, 4294901760
        %v1947 = vsub.f32 %v1568, %v1946
        %1948 = vmatpush1.msra.mxu0 %v1947
        %1949 = vmatprep.subr.mxu0 0.0
        %v1950 = vand.u32 %v1567, 4294901760
        %v1951 = vsub.f32 %v1567, %v1950
        %1952 = vmatpush1.msra.mxu0 %v1951
        %1953 = vmatprep.subr.mxu0 0.0
        %v1954 = vand.u32 %v1566, 4294901760
        %v1955 = vsub.f32 %v1566, %v1954
        %1956 = vmatpush1.msra.mxu0 %v1955
        %1957 = vmatprep.subr.mxu0 0.0
        %v1958 = vand.u32 %v1565, 4294901760
        %v1959 = vsub.f32 %v1565, %v1958
        %1960 = vmatpush1.msra.mxu0 %v1959
        %1961 = vmatprep.subr.mxu0 0.0
        %v1962 = vand.u32 %v1564, 4294901760
        %v1963 = vsub.f32 %v1564, %v1962
        %1964 = vmatpush1.msra.mxu0 %v1963
        %1965 = vmatprep.subr.mxu0 0.0
        %v1966 = vand.u32 %v1563, 4294901760
        %v1967 = vsub.f32 %v1563, %v1966
        %1968 = vmatpush1.msra.mxu0 %v1967
        %1969 = vmatprep.subr.mxu0 0.0
        %v1970 = vand.u32 %v1562, 4294901760
        %v1971 = vsub.f32 %v1562, %v1970
        %1972 = vmatpush1.msra.mxu0 %v1971
        %1973 = vmatprep.subr.mxu0 0.0
        %v1974 = vand.u32 %v1561, 4294901760
        %v1975 = vsub.f32 %v1561, %v1974
        %1976 = vmatpush1.msra.mxu0 %v1975
        %1977 = vmatprep.subr.mxu0 0.0
        %v1978 = vand.u32 %v1560, 4294901760
        %v1979 = vsub.f32 %v1560, %v1978
        %1980 = vmatpush1.msra.mxu0 %v1979
        %1981 = vmatprep.subr.mxu0 0.0
        %v1982 = vand.u32 %v1559, 4294901760
        %v1983 = vsub.f32 %v1559, %v1982
        %1984 = vmatpush1.msra.mxu0 %v1983
        %1985 = vmatprep.subr.mxu0 0.0
        %v1986 = vand.u32 %v1558, 4294901760
        %v1987 = vsub.f32 %v1558, %v1986
        %1988 = vmatpush1.msra.mxu0 %v1987
        %1989 = vmatprep.subr.mxu0 0.0
        %v1990 = vand.u32 %v1557, 4294901760
        %v1991 = vsub.f32 %v1557, %v1990
        %1992 = vmatpush1.msra.mxu0 %v1991
        %1993 = vmatprep.subr.mxu0 0.0
        %v1994 = vand.u32 %v1556, 4294901760
        %v1995 = vsub.f32 %v1556, %v1994
        %1996 = vmatpush1.msra.mxu0 %v1995
        %1997 = vmatprep.subr.mxu0 0.0
        %1998 = vmatpush2.msra.mxu0 0.0
        %1999 = vmatprep.subr.mxu0 0.0
        %2000 = vmatpush2.msra.mxu0 0.0
        %2001 = vmatprep.subr.mxu0 0.0
        %2002 = vmatpush2.msra.mxu0 0.0
        %2003 = vmatprep.subr.mxu0 0.0
        %2004 = vmatpush2.msra.mxu0 0.0
        %2005 = vmatprep.subr.mxu0 0.0
        %2006 = vmatpush2.msra.mxu0 0.0
        %2007 = vmatprep.subr.mxu0 0.0
        %2008 = vmatpush2.msra.mxu0 0.0
        %2009 = vmatprep.subr.mxu0 0.0
        %2010 = vmatpush2.msra.mxu0 0.0
        %2011 = vmatprep.subr.mxu0 0.0
        %2012 = vmatpush2.msra.mxu0 0.0
        %2013 = vmatprep.subr.mxu0 0.0
        %2014 = vmatpush2.msra.mxu0 0.0
        %2015 = vmatprep.subr.mxu0 0.0
        %2016 = vmatpush2.msra.mxu0 0.0
        %2017 = vmatprep.subr.mxu0 0.0
        %2018 = vmatpush2.msra.mxu0 0.0
        %2019 = vmatprep.subr.mxu0 0.0
        %2020 = vmatpush2.msra.mxu0 0.0
        %2021 = vmatprep.subr.mxu0 0.0
        %2022 = vmatpush2.msra.mxu0 0.0
        %2023 = vmatprep.subr.mxu0 0.0
        %2024 = vmatpush2.msra.mxu0 0.0
        %2025 = vmatprep.subr.mxu0 0.0
        %2026 = vmatpush2.msra.mxu0 0.0
        %2027 = vmatprep.subr.mxu0 0.0
        %2028 = vmatpush2.msra.mxu0 0.0
        %2029 = vmatprep.mubr.f32.mxu0 0.0
        %v2030 = vand.u32 %v1548, 4294901760
        %v2031 = vsub.f32 %v1548, %v2030
        %2032 = vmatmul.mubr.f32.gmra.mxu0 %v2031
        %v2033 = vpop.f32.mrf.mxu0
        %v2034 = vadd.f32 %v1888, %v2033
        %v2035 = vpop.f32.mrf.mxu0
        %2036 = vmatprep.mubr.f32.mxu0 0.0
        %v2037 = vand.u32 %v1549, 4294901760
        %v2038 = vsub.f32 %v1549, %v2037
        %2039 = vmatmul.mubr.f32.gmra.mxu0 %v2038
        %v2040 = vpop.f32.mrf.mxu0
        %v2041 = vadd.f32 %v1894, %v2040
        %v2042 = vpop.f32.mrf.mxu0
        %2043 = vmatprep.mubr.f32.mxu0 0.0
        %v2044 = vand.u32 %v1550, 4294901760
        %v2045 = vsub.f32 %v1550, %v2044
        %2046 = vmatmul.mubr.f32.gmra.mxu0 %v2045
        %v2047 = vpop.f32.mrf.mxu0
        %v2048 = vadd.f32 %v1900, %v2047
        %v2049 = vpop.f32.mrf.mxu0
        %2050 = vmatprep.mubr.f32.mxu0 0.0
        %v2051 = vand.u32 %v1551, 4294901760
        %v2052 = vsub.f32 %v1551, %v2051
        %2053 = vmatmul.mubr.f32.gmra.mxu0 %v2052
        %v2054 = vpop.f32.mrf.mxu0
        %v2055 = vadd.f32 %v1906, %v2054
        %v2056 = vpop.f32.mrf.mxu0
        %2057 = vmatprep.mubr.f32.mxu0 0.0
        %v2058 = vand.u32 %v1552, 4294901760
        %v2059 = vsub.f32 %v1552, %v2058
        %2060 = vmatmul.mubr.f32.gmra.mxu0 %v2059
        %v2061 = vpop.f32.mrf.mxu0
        %v2062 = vadd.f32 %v1912, %v2061
        %v2063 = vpop.f32.mrf.mxu0
        %2064 = vmatprep.mubr.f32.mxu0 0.0
        %v2065 = vand.u32 %v1553, 4294901760
        %v2066 = vsub.f32 %v1553, %v2065
        %2067 = vmatmul.mubr.f32.gmra.mxu0 %v2066
        %v2068 = vpop.f32.mrf.mxu0
        %v2069 = vadd.f32 %v1918, %v2068
        %v2070 = vpop.f32.mrf.mxu0
        %2071 = vmatprep.mubr.f32.mxu0 0.0
        %v2072 = vand.u32 %v1554, 4294901760
        %v2073 = vsub.f32 %v1554, %v2072
        %2074 = vmatmul.mubr.f32.gmra.mxu0 %v2073
        %v2075 = vpop.f32.mrf.mxu0
        %v2076 = vadd.f32 %v1924, %v2075
        %v2077 = vpop.f32.mrf.mxu0
        %2078 = vmatprep.mubr.f32.mxu0 0.0
        %v2079 = vand.u32 %v1555, 4294901760
        %v2080 = vsub.f32 %v1555, %v2079
        %2081 = vmatmul.mubr.f32.gmra.mxu0 %v2080
        %v2082 = vpop.f32.mrf.mxu0
        %v2083 = vadd.f32 %v1930, %v2082
        %v2084 = vpop.f32.mrf.mxu0
        %2085 = vdwg.mxu0
        %2086 = vmatprep.subr.mxu0 0.0
        %v2087 = vand.u32 %v1571, 4294901760
        %2088 = vmatpush1.msra.mxu0 %v2087
        %2089 = vmatprep.subr.mxu0 0.0
        %v2090 = vand.u32 %v1570, 4294901760
        %2091 = vmatpush1.msra.mxu0 %v2090
        %2092 = vmatprep.subr.mxu0 0.0
        %v2093 = vand.u32 %v1569, 4294901760
        %2094 = vmatpush1.msra.mxu0 %v2093
        %2095 = vmatprep.subr.mxu0 0.0
        %v2096 = vand.u32 %v1568, 4294901760
        %2097 = vmatpush1.msra.mxu0 %v2096
        %2098 = vmatprep.subr.mxu0 0.0
        %v2099 = vand.u32 %v1567, 4294901760
        %2100 = vmatpush1.msra.mxu0 %v2099
        %2101 = vmatprep.subr.mxu0 0.0
        %v2102 = vand.u32 %v1566, 4294901760
        %2103 = vmatpush1.msra.mxu0 %v2102
        %2104 = vmatprep.subr.mxu0 0.0
        %v2105 = vand.u32 %v1565, 4294901760
        %2106 = vmatpush1.msra.mxu0 %v2105
        %2107 = vmatprep.subr.mxu0 0.0
        %v2108 = vand.u32 %v1564, 4294901760
        %2109 = vmatpush1.msra.mxu0 %v2108
        %2110 = vmatprep.subr.mxu0 0.0
        %v2111 = vand.u32 %v1563, 4294901760
        %2112 = vmatpush1.msra.mxu0 %v2111
        %2113 = vmatprep.subr.mxu0 0.0
        %v2114 = vand.u32 %v1562, 4294901760
        %2115 = vmatpush1.msra.mxu0 %v2114
        %2116 = vmatprep.subr.mxu0 0.0
        %v2117 = vand.u32 %v1561, 4294901760
        %2118 = vmatpush1.msra.mxu0 %v2117
        %2119 = vmatprep.subr.mxu0 0.0
        %v2120 = vand.u32 %v1560, 4294901760
        %2121 = vmatpush1.msra.mxu0 %v2120
        %2122 = vmatprep.subr.mxu0 0.0
        %v2123 = vand.u32 %v1559, 4294901760
        %2124 = vmatpush1.msra.mxu0 %v2123
        %2125 = vmatprep.subr.mxu0 0.0
        %v2126 = vand.u32 %v1558, 4294901760
        %2127 = vmatpush1.msra.mxu0 %v2126
        %2128 = vmatprep.subr.mxu0 0.0
        %v2129 = vand.u32 %v1557, 4294901760
        %2130 = vmatpush1.msra.mxu0 %v2129
        %2131 = vmatprep.subr.mxu0 0.0
        %v2132 = vand.u32 %v1556, 4294901760
        %2133 = vmatpush1.msra.mxu0 %v2132
        %2134 = vmatprep.subr.mxu0 0.0
        %2135 = vmatpush2.msra.mxu0 0.0
        %2136 = vmatprep.subr.mxu0 0.0
        %2137 = vmatpush2.msra.mxu0 0.0
        %2138 = vmatprep.subr.mxu0 0.0
        %2139 = vmatpush2.msra.mxu0 0.0
        %2140 = vmatprep.subr.mxu0 0.0
        %2141 = vmatpush2.msra.mxu0 0.0
        %2142 = vmatprep.subr.mxu0 0.0
        %2143 = vmatpush2.msra.mxu0 0.0
        %2144 = vmatprep.subr.mxu0 0.0
        %2145 = vmatpush2.msra.mxu0 0.0
        %2146 = vmatprep.subr.mxu0 0.0
        %2147 = vmatpush2.msra.mxu0 0.0
        %2148 = vmatprep.subr.mxu0 0.0
        %2149 = vmatpush2.msra.mxu0 0.0
        %2150 = vmatprep.subr.mxu0 0.0
        %2151 = vmatpush2.msra.mxu0 0.0
        %2152 = vmatprep.subr.mxu0 0.0
        %2153 = vmatpush2.msra.mxu0 0.0
        %2154 = vmatprep.subr.mxu0 0.0
        %2155 = vmatpush2.msra.mxu0 0.0
        %2156 = vmatprep.subr.mxu0 0.0
        %2157 = vmatpush2.msra.mxu0 0.0
        %2158 = vmatprep.subr.mxu0 0.0
        %2159 = vmatpush2.msra.mxu0 0.0
        %2160 = vmatprep.subr.mxu0 0.0
        %2161 = vmatpush2.msra.mxu0 0.0
        %2162 = vmatprep.subr.mxu0 0.0
        %2163 = vmatpush2.msra.mxu0 0.0
        %2164 = vmatprep.subr.mxu0 0.0
        %2165 = vmatpush2.msra.mxu0 0.0
        %2166 = vmatprep.mubr.f32.mxu0 0.0
        %v2167 = vand.u32 %v1548, 4294901760
        %v2168 = vsub.f32 %v1548, %v2167
        %v2169 = vand.u32 %v2168, 4294901760
        %2170 = vmatmul.mubr.f32.gmra.mxu0 %v2169
        %v2171 = vpop.f32.mrf.mxu0
        %v2172 = vadd.f32 %v2034, %v2171
        %v2173 = vpop.f32.mrf.mxu0
        %2174 = vmatprep.mubr.f32.mxu0 0.0
        %v2175 = vand.u32 %v1549, 4294901760
        %v2176 = vsub.f32 %v1549, %v2175
        %v2177 = vand.u32 %v2176, 4294901760
        %2178 = vmatmul.mubr.f32.gmra.mxu0 %v2177
        %v2179 = vpop.f32.mrf.mxu0
        %v2180 = vadd.f32 %v2041, %v2179
        %v2181 = vpop.f32.mrf.mxu0
        %2182 = vmatprep.mubr.f32.mxu0 0.0
        %v2183 = vand.u32 %v1550, 4294901760
        %v2184 = vsub.f32 %v1550, %v2183
        %v2185 = vand.u32 %v2184, 4294901760
        %2186 = vmatmul.mubr.f32.gmra.mxu0 %v2185
        %v2187 = vpop.f32.mrf.mxu0
        %v2188 = vadd.f32 %v2048, %v2187
        %v2189 = vpop.f32.mrf.mxu0
        %2190 = vmatprep.mubr.f32.mxu0 0.0
        %v2191 = vand.u32 %v1551, 4294901760
        %v2192 = vsub.f32 %v1551, %v2191
        %v2193 = vand.u32 %v2192, 4294901760
        %2194 = vmatmul.mubr.f32.gmra.mxu0 %v2193
        %v2195 = vpop.f32.mrf.mxu0
        %v2196 = vadd.f32 %v2055, %v2195
        %v2197 = vpop.f32.mrf.mxu0
        %2198 = vmatprep.mubr.f32.mxu0 0.0
        %v2199 = vand.u32 %v1552, 4294901760
        %v2200 = vsub.f32 %v1552, %v2199
        %v2201 = vand.u32 %v2200, 4294901760
        %2202 = vmatmul.mubr.f32.gmra.mxu0 %v2201
        %v2203 = vpop.f32.mrf.mxu0
        %v2204 = vadd.f32 %v2062, %v2203
        %v2205 = vpop.f32.mrf.mxu0
        %2206 = vmatprep.mubr.f32.mxu0 0.0
        %v2207 = vand.u32 %v1553, 4294901760
        %v2208 = vsub.f32 %v1553, %v2207
        %v2209 = vand.u32 %v2208, 4294901760
        %2210 = vmatmul.mubr.f32.gmra.mxu0 %v2209
        %v2211 = vpop.f32.mrf.mxu0
        %v2212 = vadd.f32 %v2069, %v2211
        %v2213 = vpop.f32.mrf.mxu0
        %2214 = vmatprep.mubr.f32.mxu0 0.0
        %v2215 = vand.u32 %v1554, 4294901760
        %v2216 = vsub.f32 %v1554, %v2215
        %v2217 = vand.u32 %v2216, 4294901760
        %2218 = vmatmul.mubr.f32.gmra.mxu0 %v2217
        %v2219 = vpop.f32.mrf.mxu0
        %v2220 = vadd.f32 %v2076, %v2219
        %v2221 = vpop.f32.mrf.mxu0
        %2222 = vmatprep.mubr.f32.mxu0 0.0
        %v2223 = vand.u32 %v1555, 4294901760
        %v2224 = vsub.f32 %v1555, %v2223
        %v2225 = vand.u32 %v2224, 4294901760
        %2226 = vmatmul.mubr.f32.gmra.mxu0 %v2225
        %v2227 = vpop.f32.mrf.mxu0
        %v2228 = vadd.f32 %v2083, %v2227
        %v2229 = vpop.f32.mrf.mxu0
        %2230 = vdwg.mxu0
        %2231 = vmatprep.subr.mxu0 0.0
        %v2232 = vand.u32 %v1571, 4294901760
        %v2233 = vsub.f32 %v1571, %v2232
        %v2234 = vand.u32 %v2233, 4294901760
        %2235 = vmatpush1.msra.mxu0 %v2234
        %2236 = vmatprep.subr.mxu0 0.0
        %v2237 = vand.u32 %v1570, 4294901760
        %v2238 = vsub.f32 %v1570, %v2237
        %v2239 = vand.u32 %v2238, 4294901760
        %2240 = vmatpush1.msra.mxu0 %v2239
        %2241 = vmatprep.subr.mxu0 0.0
        %v2242 = vand.u32 %v1569, 4294901760
        %v2243 = vsub.f32 %v1569, %v2242
        %v2244 = vand.u32 %v2243, 4294901760
        %2245 = vmatpush1.msra.mxu0 %v2244
        %2246 = vmatprep.subr.mxu0 0.0
        %v2247 = vand.u32 %v1568, 4294901760
        %v2248 = vsub.f32 %v1568, %v2247
        %v2249 = vand.u32 %v2248, 4294901760
        %2250 = vmatpush1.msra.mxu0 %v2249
        %2251 = vmatprep.subr.mxu0 0.0
        %v2252 = vand.u32 %v1567, 4294901760
        %v2253 = vsub.f32 %v1567, %v2252
        %v2254 = vand.u32 %v2253, 4294901760
        %2255 = vmatpush1.msra.mxu0 %v2254
        %2256 = vmatprep.subr.mxu0 0.0
        %v2257 = vand.u32 %v1566, 4294901760
        %v2258 = vsub.f32 %v1566, %v2257
        %v2259 = vand.u32 %v2258, 4294901760
        %2260 = vmatpush1.msra.mxu0 %v2259
        %2261 = vmatprep.subr.mxu0 0.0
        %v2262 = vand.u32 %v1565, 4294901760
        %v2263 = vsub.f32 %v1565, %v2262
        %v2264 = vand.u32 %v2263, 4294901760
        %2265 = vmatpush1.msra.mxu0 %v2264
        %2266 = vmatprep.subr.mxu0 0.0
        %v2267 = vand.u32 %v1564, 4294901760
        %v2268 = vsub.f32 %v1564, %v2267
        %v2269 = vand.u32 %v2268, 4294901760
        %2270 = vmatpush1.msra.mxu0 %v2269
        %2271 = vmatprep.subr.mxu0 0.0
        %v2272 = vand.u32 %v1563, 4294901760
        %v2273 = vsub.f32 %v1563, %v2272
        %v2274 = vand.u32 %v2273, 4294901760
        %2275 = vmatpush1.msra.mxu0 %v2274
        %2276 = vmatprep.subr.mxu0 0.0
        %v2277 = vand.u32 %v1562, 4294901760
        %v2278 = vsub.f32 %v1562, %v2277
        %v2279 = vand.u32 %v2278, 4294901760
        %2280 = vmatpush1.msra.mxu0 %v2279
        %2281 = vmatprep.subr.mxu0 0.0
        %v2282 = vand.u32 %v1561, 4294901760
        %v2283 = vsub.f32 %v1561, %v2282
        %v2284 = vand.u32 %v2283, 4294901760
        %2285 = vmatpush1.msra.mxu0 %v2284
        %2286 = vmatprep.subr.mxu0 0.0
        %v2287 = vand.u32 %v1560, 4294901760
        %v2288 = vsub.f32 %v1560, %v2287
        %v2289 = vand.u32 %v2288, 4294901760
        %2290 = vmatpush1.msra.mxu0 %v2289
        %2291 = vmatprep.subr.mxu0 0.0
        %v2292 = vand.u32 %v1559, 4294901760
        %v2293 = vsub.f32 %v1559, %v2292
        %v2294 = vand.u32 %v2293, 4294901760
        %2295 = vmatpush1.msra.mxu0 %v2294
        %2296 = vmatprep.subr.mxu0 0.0
        %v2297 = vand.u32 %v1558, 4294901760
        %v2298 = vsub.f32 %v1558, %v2297
        %v2299 = vand.u32 %v2298, 4294901760
        %2300 = vmatpush1.msra.mxu0 %v2299
        %2301 = vmatprep.subr.mxu0 0.0
        %v2302 = vand.u32 %v1557, 4294901760
        %v2303 = vsub.f32 %v1557, %v2302
        %v2304 = vand.u32 %v2303, 4294901760
        %2305 = vmatpush1.msra.mxu0 %v2304
        %2306 = vmatprep.subr.mxu0 0.0
        %v2307 = vand.u32 %v1556, 4294901760
        %v2308 = vsub.f32 %v1556, %v2307
        %v2309 = vand.u32 %v2308, 4294901760
        %2310 = vmatpush1.msra.mxu0 %v2309
        %2311 = vmatprep.subr.mxu0 0.0
        %2312 = vmatpush2.msra.mxu0 0.0
        %2313 = vmatprep.subr.mxu0 0.0
        %2314 = vmatpush2.msra.mxu0 0.0
        %2315 = vmatprep.subr.mxu0 0.0
        %2316 = vmatpush2.msra.mxu0 0.0
        %2317 = vmatprep.subr.mxu0 0.0
        %2318 = vmatpush2.msra.mxu0 0.0
        %2319 = vmatprep.subr.mxu0 0.0
        %2320 = vmatpush2.msra.mxu0 0.0
        %2321 = vmatprep.subr.mxu0 0.0
        %2322 = vmatpush2.msra.mxu0 0.0
        %2323 = vmatprep.subr.mxu0 0.0
        %2324 = vmatpush2.msra.mxu0 0.0
        %2325 = vmatprep.subr.mxu0 0.0
        %2326 = vmatpush2.msra.mxu0 0.0
        %2327 = vmatprep.subr.mxu0 0.0
        %2328 = vmatpush2.msra.mxu0 0.0
        %2329 = vmatprep.subr.mxu0 0.0
        %2330 = vmatpush2.msra.mxu0 0.0
        %2331 = vmatprep.subr.mxu0 0.0
        %2332 = vmatpush2.msra.mxu0 0.0
        %2333 = vmatprep.subr.mxu0 0.0
        %2334 = vmatpush2.msra.mxu0 0.0
        %2335 = vmatprep.subr.mxu0 0.0
        %2336 = vmatpush2.msra.mxu0 0.0
        %2337 = vmatprep.subr.mxu0 0.0
        %2338 = vmatpush2.msra.mxu0 0.0
        %2339 = vmatprep.subr.mxu0 0.0
        %2340 = vmatpush2.msra.mxu0 0.0
        %2341 = vmatprep.subr.mxu0 0.0
        %2342 = vmatpush2.msra.mxu0 0.0
        %2343 = vmatprep.mubr.f32.mxu0 0.0
        %v2344 = vand.u32 %v1548, 4294901760
        %2345 = vmatmul.mubr.f32.gmra.mxu0 %v2344
        %v2346 = vpop.f32.mrf.mxu0
        %v2347 = vadd.f32 %v2172, %v2346
        %v2348 = vpop.f32.mrf.mxu0
        %2349 = vmatprep.mubr.f32.mxu0 0.0
        %v2350 = vand.u32 %v1549, 4294901760
        %2351 = vmatmul.mubr.f32.gmra.mxu0 %v2350
        %v2352 = vpop.f32.mrf.mxu0
        %v2353 = vadd.f32 %v2180, %v2352
        %v2354 = vpop.f32.mrf.mxu0
        %2355 = vmatprep.mubr.f32.mxu0 0.0
        %v2356 = vand.u32 %v1550, 4294901760
        %2357 = vmatmul.mubr.f32.gmra.mxu0 %v2356
        %v2358 = vpop.f32.mrf.mxu0
        %v2359 = vadd.f32 %v2188, %v2358
        %v2360 = vpop.f32.mrf.mxu0
        %2361 = vmatprep.mubr.f32.mxu0 0.0
        %v2362 = vand.u32 %v1551, 4294901760
        %2363 = vmatmul.mubr.f32.gmra.mxu0 %v2362
        %v2364 = vpop.f32.mrf.mxu0
        %v2365 = vadd.f32 %v2196, %v2364
        %v2366 = vpop.f32.mrf.mxu0
        %2367 = vmatprep.mubr.f32.mxu0 0.0
        %v2368 = vand.u32 %v1552, 4294901760
        %2369 = vmatmul.mubr.f32.gmra.mxu0 %v2368
        %v2370 = vpop.f32.mrf.mxu0
        %v2371 = vadd.f32 %v2204, %v2370
        %v2372 = vpop.f32.mrf.mxu0
        %2373 = vmatprep.mubr.f32.mxu0 0.0
        %v2374 = vand.u32 %v1553, 4294901760
        %2375 = vmatmul.mubr.f32.gmra.mxu0 %v2374
        %v2376 = vpop.f32.mrf.mxu0
        %v2377 = vadd.f32 %v2212, %v2376
        %v2378 = vpop.f32.mrf.mxu0
        %2379 = vmatprep.mubr.f32.mxu0 0.0
        %v2380 = vand.u32 %v1554, 4294901760
        %2381 = vmatmul.mubr.f32.gmra.mxu0 %v2380
        %v2382 = vpop.f32.mrf.mxu0
        %v2383 = vadd.f32 %v2220, %v2382
        %v2384 = vpop.f32.mrf.mxu0
        %2385 = vmatprep.mubr.f32.mxu0 0.0
        %v2386 = vand.u32 %v1555, 4294901760
        %2387 = vmatmul.mubr.f32.gmra.mxu0 %v2386
        %v2388 = vpop.f32.mrf.mxu0
        %v2389 = vadd.f32 %v2228, %v2388
        %v2390 = vpop.f32.mrf.mxu0
        %2391 = vdwg.mxu0
        %2392 = vmatprep.subr.mxu0 0.0
        %v2393 = vand.u32 %v1571, 4294901760
        %2394 = vmatpush1.msra.mxu0 %v2393
        %2395 = vmatprep.subr.mxu0 0.0
        %v2396 = vand.u32 %v1570, 4294901760
        %2397 = vmatpush1.msra.mxu0 %v2396
        %2398 = vmatprep.subr.mxu0 0.0
        %v2399 = vand.u32 %v1569, 4294901760
        %2400 = vmatpush1.msra.mxu0 %v2399
        %2401 = vmatprep.subr.mxu0 0.0
        %v2402 = vand.u32 %v1568, 4294901760
        %2403 = vmatpush1.msra.mxu0 %v2402
        %2404 = vmatprep.subr.mxu0 0.0
        %v2405 = vand.u32 %v1567, 4294901760
        %2406 = vmatpush1.msra.mxu0 %v2405
        %2407 = vmatprep.subr.mxu0 0.0
        %v2408 = vand.u32 %v1566, 4294901760
        %2409 = vmatpush1.msra.mxu0 %v2408
        %2410 = vmatprep.subr.mxu0 0.0
        %v2411 = vand.u32 %v1565, 4294901760
        %2412 = vmatpush1.msra.mxu0 %v2411
        %2413 = vmatprep.subr.mxu0 0.0
        %v2414 = vand.u32 %v1564, 4294901760
        %2415 = vmatpush1.msra.mxu0 %v2414
        %2416 = vmatprep.subr.mxu0 0.0
        %v2417 = vand.u32 %v1563, 4294901760
        %2418 = vmatpush1.msra.mxu0 %v2417
        %2419 = vmatprep.subr.mxu0 0.0
        %v2420 = vand.u32 %v1562, 4294901760
        %2421 = vmatpush1.msra.mxu0 %v2420
        %2422 = vmatprep.subr.mxu0 0.0
        %v2423 = vand.u32 %v1561, 4294901760
        %2424 = vmatpush1.msra.mxu0 %v2423
        %2425 = vmatprep.subr.mxu0 0.0
        %v2426 = vand.u32 %v1560, 4294901760
        %2427 = vmatpush1.msra.mxu0 %v2426
        %2428 = vmatprep.subr.mxu0 0.0
        %v2429 = vand.u32 %v1559, 4294901760
        %2430 = vmatpush1.msra.mxu0 %v2429
        %2431 = vmatprep.subr.mxu0 0.0
        %v2432 = vand.u32 %v1558, 4294901760
        %2433 = vmatpush1.msra.mxu0 %v2432
        %2434 = vmatprep.subr.mxu0 0.0
        %v2435 = vand.u32 %v1557, 4294901760
        %2436 = vmatpush1.msra.mxu0 %v2435
        %2437 = vmatprep.subr.mxu0 0.0
        %v2438 = vand.u32 %v1556, 4294901760
        %2439 = vmatpush1.msra.mxu0 %v2438
        %2440 = vmatprep.subr.mxu0 0.0
        %2441 = vmatpush2.msra.mxu0 0.0
        %2442 = vmatprep.subr.mxu0 0.0
        %2443 = vmatpush2.msra.mxu0 0.0
        %2444 = vmatprep.subr.mxu0 0.0
        %2445 = vmatpush2.msra.mxu0 0.0
        %2446 = vmatprep.subr.mxu0 0.0
        %2447 = vmatpush2.msra.mxu0 0.0
        %2448 = vmatprep.subr.mxu0 0.0
        %2449 = vmatpush2.msra.mxu0 0.0
        %2450 = vmatprep.subr.mxu0 0.0
        %2451 = vmatpush2.msra.mxu0 0.0
        %2452 = vmatprep.subr.mxu0 0.0
        %2453 = vmatpush2.msra.mxu0 0.0
        %2454 = vmatprep.subr.mxu0 0.0
        %2455 = vmatpush2.msra.mxu0 0.0
        %2456 = vmatprep.subr.mxu0 0.0
        %2457 = vmatpush2.msra.mxu0 0.0
        %2458 = vmatprep.subr.mxu0 0.0
        %2459 = vmatpush2.msra.mxu0 0.0
        %2460 = vmatprep.subr.mxu0 0.0
        %2461 = vmatpush2.msra.mxu0 0.0
        %2462 = vmatprep.subr.mxu0 0.0
        %2463 = vmatpush2.msra.mxu0 0.0
        %2464 = vmatprep.subr.mxu0 0.0
        %2465 = vmatpush2.msra.mxu0 0.0
        %2466 = vmatprep.subr.mxu0 0.0
        %2467 = vmatpush2.msra.mxu0 0.0
        %2468 = vmatprep.subr.mxu0 0.0
        %2469 = vmatpush2.msra.mxu0 0.0
        %2470 = vmatprep.subr.mxu0 0.0
        %2471 = vmatpush2.msra.mxu0 0.0
        %2472 = vmatprep.mubr.f32.mxu0 0.0
        %v2473 = vand.u32 %v1548, 4294901760
        %2474 = vmatmul.mubr.f32.gmra.mxu0 %v2473
        %v2475 = vpop.f32.mrf.mxu0
        %v2476 = vadd.f32 %v2347, %v2475
        %v2477 = vpop.f32.mrf.mxu0
        %2478 = vmatprep.mubr.f32.mxu0 0.0
        %v2479 = vand.u32 %v1549, 4294901760
        %2480 = vmatmul.mubr.f32.gmra.mxu0 %v2479
        %v2481 = vpop.f32.mrf.mxu0
        %v2482 = vadd.f32 %v2353, %v2481
        %v2483 = vpop.f32.mrf.mxu0
        %2484 = vmatprep.mubr.f32.mxu0 0.0
        %v2485 = vand.u32 %v1550, 4294901760
        %2486 = vmatmul.mubr.f32.gmra.mxu0 %v2485
        %v2487 = vpop.f32.mrf.mxu0
        %v2488 = vadd.f32 %v2359, %v2487
        %v2489 = vpop.f32.mrf.mxu0
        %2490 = vmatprep.mubr.f32.mxu0 0.0
        %v2491 = vand.u32 %v1551, 4294901760
        %2492 = vmatmul.mubr.f32.gmra.mxu0 %v2491
        %v2493 = vpop.f32.mrf.mxu0
        %v2494 = vadd.f32 %v2365, %v2493
        %v2495 = vpop.f32.mrf.mxu0
        %2496 = vmatprep.mubr.f32.mxu0 0.0
        %v2497 = vand.u32 %v1552, 4294901760
        %2498 = vmatmul.mubr.f32.gmra.mxu0 %v2497
        %v2499 = vpop.f32.mrf.mxu0
        %v2500 = vadd.f32 %v2371, %v2499
        %v2501 = vpop.f32.mrf.mxu0
        %2502 = vmatprep.mubr.f32.mxu0 0.0
        %v2503 = vand.u32 %v1553, 4294901760
        %2504 = vmatmul.mubr.f32.gmra.mxu0 %v2503
        %v2505 = vpop.f32.mrf.mxu0
        %v2506 = vadd.f32 %v2377, %v2505
        %v2507 = vpop.f32.mrf.mxu0
        %2508 = vmatprep.mubr.f32.mxu0 0.0
        %v2509 = vand.u32 %v1554, 4294901760
        %2510 = vmatmul.mubr.f32.gmra.mxu0 %v2509
        %v2511 = vpop.f32.mrf.mxu0
        %v2512 = vadd.f32 %v2383, %v2511
        %v2513 = vpop.f32.mrf.mxu0
        %2514 = vmatprep.mubr.f32.mxu0 0.0
        %v2515 = vand.u32 %v1555, 4294901760
        %2516 = vmatmul.mubr.f32.gmra.mxu0 %v2515
        %v2517 = vpop.f32.mrf.mxu0
        %v2518 = vadd.f32 %v2389, %v2517
        %v2519 = vpop.f32.mrf.mxu0
        %2520 = vdwg.mxu0
        %v2521 = vsel %vm968, %v2476, -inf
        %2522 = vmax.xlane.f32.xlu0 %v2521
        %v2523 = vpop.xlane.xlu0 %2522
        %v2524 = vsel %vm968, %v2482, -inf
        %2525 = vmax.xlane.f32.xlu0 %v2524
        %v2526 = vpop.xlane.xlu0 %2525
        %v2527 = vsel %vm968, %v2488, -inf
        %2528 = vmax.xlane.f32.xlu0 %v2527
        %v2529 = vpop.xlane.xlu0 %2528
        %v2530 = vsel %vm968, %v2494, -inf
        %2531 = vmax.xlane.f32.xlu0 %v2530
        %v2532 = vpop.xlane.xlu0 %2531
        %v2533 = vsel %vm968, %v2500, -inf
        %2534 = vmax.xlane.f32.xlu0 %v2533
        %v2535 = vpop.xlane.xlu0 %2534
        %v2536 = vsel %vm968, %v2506, -inf
        %2537 = vmax.xlane.f32.xlu0 %v2536
        %v2538 = vpop.xlane.xlu0 %2537
        %v2539 = vsel %vm968, %v2512, -inf
        %2540 = vmax.xlane.f32.xlu0 %v2539
        %v2541 = vpop.xlane.xlu0 %2540
        %v2542 = vsel %vm968, %v2518, -inf
        %2543 = vmax.xlane.f32.xlu0 %v2542
        %v2544 = vpop.xlane.xlu0 %2543
        %v2545 = vsub.f32 %v2476, %v2523
        %v2546 = vsub.f32 %v2482, %v2526
        %v2547 = vsub.f32 %v2488, %v2529
        %v2548 = vsub.f32 %v2494, %v2532
        %v2549 = vsub.f32 %v2500, %v2535
        %v2550 = vsub.f32 %v2506, %v2538
        %v2551 = vsub.f32 %v2512, %v2541
        %v2552 = vsub.f32 %v2518, %v2544
        %v2553 = vmul.f32 %v2545, 1.442695
        %v2554 = vpow.pop %v2553
        %v2555 = vmul.f32 %v2546, 1.442695
        %v2556 = vpow.pop %v2555
        %v2557 = vmul.f32 %v2547, 1.442695
        %v2558 = vpow.pop %v2557
        %v2559 = vmul.f32 %v2548, 1.442695
        %v2560 = vpow.pop %v2559
        %v2561 = vmul.f32 %v2549, 1.442695
        %v2562 = vpow.pop %v2561
        %v2563 = vmul.f32 %v2550, 1.442695
        %v2564 = vpow.pop %v2563
        %v2565 = vmul.f32 %v2551, 1.442695
        %v2566 = vpow.pop %v2565
        %v2567 = vmul.f32 %v2552, 1.442695
        %v2568 = vpow.pop %v2567
        %v2569 = vsel %vm968, %v2554, 0.0
        %2570 = vadd.xlane.f32.xlu0 %v2569
        %v2571 = vpop.xlane.xlu0 %2570
        %v2572 = vsel %vm968, %v2556, 0.0
        %2573 = vadd.xlane.f32.xlu0 %v2572
        %v2574 = vpop.xlane.xlu0 %2573
        %v2575 = vsel %vm968, %v2558, 0.0
        %2576 = vadd.xlane.f32.xlu0 %v2575
        %v2577 = vpop.xlane.xlu0 %2576
        %v2578 = vsel %vm968, %v2560, 0.0
        %2579 = vadd.xlane.f32.xlu0 %v2578
        %v2580 = vpop.xlane.xlu0 %2579
        %v2581 = vsel %vm968, %v2562, 0.0
        %2582 = vadd.xlane.f32.xlu0 %v2581
        %v2583 = vpop.xlane.xlu0 %2582
        %v2584 = vsel %vm968, %v2564, 0.0
        %2585 = vadd.xlane.f32.xlu0 %v2584
        %v2586 = vpop.xlane.xlu0 %2585
        %v2587 = vsel %vm968, %v2566, 0.0
        %2588 = vadd.xlane.f32.xlu0 %v2587
        %v2589 = vpop.xlane.xlu0 %2588
        %v2590 = vsel %vm968, %v2568, 0.0
        %2591 = vadd.xlane.f32.xlu0 %v2590
        %v2592 = vpop.xlane.xlu0 %2591
        %v2593 = vlog2.pop %v2571
        %v2594 = vmul.f32 %v2593, 0.6931472
        %v2595 = vlog2.pop %v2574
        %v2596 = vmul.f32 %v2595, 0.6931472
        %v2597 = vlog2.pop %v2577
        %v2598 = vmul.f32 %v2597, 0.6931472
        %v2599 = vlog2.pop %v2580
        %v2600 = vmul.f32 %v2599, 0.6931472
        %v2601 = vlog2.pop %v2583
        %v2602 = vmul.f32 %v2601, 0.6931472
        %v2603 = vlog2.pop %v2586
        %v2604 = vmul.f32 %v2603, 0.6931472
        %v2605 = vlog2.pop %v2589
        %v2606 = vmul.f32 %v2605, 0.6931472
        %v2607 = vlog2.pop %v2592
        %v2608 = vmul.f32 %v2607, 0.6931472
        %v2609 = vsub.f32 %v2545, %v2594
        %v2610 = vsub.f32 %v2546, %v2596
        %v2611 = vsub.f32 %v2547, %v2598
        %v2612 = vsub.f32 %v2548, %v2600
        %v2613 = vsub.f32 %v2549, %v2602
        %v2614 = vsub.f32 %v2550, %v2604
        %v2615 = vsub.f32 %v2551, %v2606
        %v2616 = vsub.f32 %v2552, %v2608
        %2618 = vrot.lane.b32.xlu0 %v2610, 32
        %v2619 = vpop.permute.xlu0 %2618
        %2622 = vrot.lane.b32.xlu0 %v2611, 64
        %v2623 = vpop.permute.xlu0 %2622
        %2626 = vrot.lane.b32.xlu0 %v2612, 96
        %v2627 = vpop.permute.xlu0 %2626
        %2630 = vrot.lane.b32.xlu0 %v2614, 32
        %v2631 = vpop.permute.xlu0 %2630
        %2634 = vrot.lane.b32.xlu0 %v2615, 64
        %v2635 = vpop.permute.xlu0 %2634
        %2638 = vrot.lane.b32.xlu0 %v2616, 96
        %v2639 = vpop.permute.xlu0 %2638
        %v2641 = vsel %vm968, %v2609, %v2619
        %vm2642 = vcmask 523264
        %v2643 = vsel %vm2642, %v2641, %v2623
        %v2644 = vsel %vm363, %v2643, %v2627
        %v2645 = vsel %vm968, %v2613, %v2631
        %v2646 = vsel %vm2642, %v2645, %v2635
        %v2647 = vsel %vm363, %v2646, %v2639
        %2648 = vst [vmem:[%s331] sm:$0xff] %v2644
        %2649 = vst [vmem:[%s331 + $0x8] sm:$0xff] %v2647
        %s2650 = sand.u32 %s224, 1
        %s2651 = scalar_lea.sflag [#allocation3], %s2650
        %s2652 = sand.u32 %s224, 1
        %s2653 = smul.addr %s2652, 16
        %s2654 = scalar_lea.vmem [#allocation2], %s2653
        // Predicated region
        $region53: #{tpu_custom_call.1} parent=51 // pred_check
          %p2655 = pneg %p234
        $region54: #{tpu_custom_call.1} parent=51 // pred_check_branch
          %2657 = sbr.rel (%p2655) target = $region56
        $region55: #{tpu_custom_call.1} parent=51 // pred_region
          %s2659 = ssub.s32 256, 256
          %2660 = vsyncadd %s2651, %s2659
          %s2661 = smul.addr %s27, 2
          %s2662 = smul.addr %s26, 2
          %s2663 = sadd.s32 %s2661, %s2662
          %s2664 = smul.addr %s2663, 128
          %s2665 = scalar_lea.hbm %s8, %s2664
          %s2667 = sshll.u32 %s2654, 4
          %s2668 = int_to_ptr.vmem [resolvable:$true] %s2667
          %2670 = dma.vmem_to_hbm [thread:$0]  %s2668, 256, %s2665, %s2651
        $region56: #{tpu_custom_call.1} parent=51 // pred_fallthru
          _
      $region52: #{tpu_custom_call.1} parent=5 // pred_fallthru
        _
      %p2671 = scmp.le.s32.totalorder 2, %s17
      // Predicated region
      $region57: #{tpu_custom_call.1} parent=5 // pred_check
        %p2672 = pneg %p2671
      $region58: #{tpu_custom_call.1} parent=5 // pred_check_branch
        %2674 = sbr.rel (%p2672) target = $region60
      $region59: #{tpu_custom_call.1} parent=5 // pred_region
        %s2675 = ssub.s32 %s17, 2
        // Predicated region
        $region61: #{tpu_custom_call.1} parent=59 // pred_check
          %p2676 = pneg %p240
        $region62: #{tpu_custom_call.1} parent=59 // pred_check_branch
          %2678 = sbr.rel (%p2676) target = $region64
        $region63: #{tpu_custom_call.1} parent=59 // pred_region
          %s2679 = sand.u32 %s225, 1
          %s2680 = scalar_lea.sflag [#allocation3], %s2679
          %s2681 = sand.u32 %s225, 1
          %s2682 = smul.addr %s2681, 16
          %s2683 = scalar_lea.vmem [#allocation2], %s2682
          %2684 = dma.done %s2680, 256
        $region64: #{tpu_custom_call.1} parent=59 // pred_fallthru
          _
      $region60: #{tpu_custom_call.1} parent=5 // pred_fallthru
        _
    $region6: #{tpu_custom_call.1} parent=1 // loop_footer
      %s21 = sadd.s32 1, %s17
    $region7: #{tpu_custom_call.1} parent=1 // loop_footer_branch
      %16 = sbr.rel target = $region3
    $region8: #{tpu_custom_call.1} parent=1 // loop_exit
      _
    %2685 = vsyncpa [#allocation3], 1
    %s2686 = scalar_lea.sflag [#allocation3], 1
    %2687 = vsyncpa %s2686, 1

</llo_original>
